<compile_context>
chip_gen: v7x
topology: tpu7x:2x2x1
jax: 0.10.0
libtpu: 0.0.40
codegen_flags: <defaults>
</compile_context>

<pallas_src>
import functools

import jax
import jax.numpy as jnp
from jax.experimental import pallas as pl
from jax.experimental.pallas import tpu as pltpu

LN_EPS = 1e-5
_LANE = 128
_ROW = 16          # row-tile granularity: legal sublane multiple for bf16 & f32

# Slab row layout (one (16, Hp) f32 slab per branch):
#   0: fused bias   1: ln_gamma   2: ln_beta   3: real-lane mask (1.0 iff j < H)
#   4..10: conv taps k=0..6 with the Conv1d zero-padding mask baked per lane
#   11..15: zero padding


def _round_up(x, m):
    return (x + m - 1) // m * m


def _pad2(x, rows, cols):
    return jnp.pad(x, ((0, rows - x.shape[0]), (0, cols - x.shape[1])))


def _blockdiag(a, b):
    n1, m1 = a.shape
    n2, m2 = b.shape
    out = jnp.zeros((n1 + n2, m1 + m2), a.dtype)
    return out.at[:n1, :m1].set(a).at[n1:, m1:].set(b)


def _mxu_is_256_wide():
    """True on chips with 256x256 MXUs (v6e / v7x); False on v4/v5 family."""
    try:
        kind = jax.devices()[0].device_kind.lower()
    except Exception:
        return False
    return ("v6" in kind) or ("v7" in kind) or ("7x" in kind)


# ---------------------------------------------------------------------------
# In-kernel helpers (all operate on f32 (TB, Hp) tiles)
# ---------------------------------------------------------------------------
def _layernorm(y, slab, H):
    """LayerNorm over the real H lanes; padded lanes stay exactly zero."""
    inv_h = 1.0 / H
    mu = jnp.sum(y, axis=-1, keepdims=True) * inv_h        # pad lanes are 0
    d = (y - mu) * slab[3:4, :]                             # two-pass var, masked
    var = jnp.sum(d * d, axis=-1, keepdims=True) * inv_h
    return d * jax.lax.rsqrt(var + LN_EPS) * slab[1:2, :] + slab[2:3, :]


def _spatial_conv_gate(y, slab, Hp):
    """CBAM spatial attention: 7-tap Conv1d(pad=3, no bias) on [y, y].

    Tap weights (slab rows 4..10) carry the conv zero-padding mask baked per
    output lane, so this is just XLU rolls + VPU FMAs (no iota/select, no MXU).
    """
    conv = slab[7:8, :] * y                                  # center tap (k=3)
    for k in range(7):
        if k == 3:
            continue
        d = k - 3                                            # gather y[:, j + d]
        shifted = pltpu.roll(y, (-d) % Hp, axis=1)           # == jnp.roll
        conv = conv + slab[4 + k:5 + k, :] * shifted
    # TODO(synk): if the vector-extended slot ever saturates at large Hp, the
    # 6 rolls here share it with MXU pushes; verify in the bundle dump first.
    return y * jax.nn.sigmoid(conv)


def _branch(query_f32, kv_bf16, w, m1, m2, slab, *, H, Hp):
    """One fused cross-attention + LayerNorm + CBAM1D branch (separate dots)."""
    y = (jnp.dot(kv_bf16, w, preferred_element_type=jnp.float32)
         + slab[0:1, :] + query_f32)
    y = _layernorm(y, slab, H)
    h = jax.nn.relu(jnp.dot(y.astype(jnp.bfloat16), m1,
                            preferred_element_type=jnp.float32))
    ca = 2.0 * jax.nn.sigmoid(jnp.dot(h.astype(jnp.bfloat16), m2,
                                      preferred_element_type=jnp.float32))
    return _spatial_conv_gate(y * ca, slab, Hp)


# ---------------------------------------------------------------------------
# Kernels
# ---------------------------------------------------------------------------
def fusion_kernel(text_ref, audio_ref,
                  a_w_ref, a_m1_ref, a_m2_ref, a_slab_ref,
                  t_w_ref, t_m1_ref, t_m2_ref, t_slab_ref,
                  out_ref, *, H, Hp):
    """Two separate branch dots (v5e / v5p path: 128-wide MXUs)."""
    text_bf = text_ref[...]
    audio_bf = audio_ref[...]
    text = text_bf.astype(jnp.float32)
    audio = audio_bf.astype(jnp.float32)

    a_out = _branch(text, audio_bf, a_w_ref[...], a_m1_ref[...], a_m2_ref[...],
                    a_slab_ref[...], H=H, Hp=Hp)
    t_out = _branch(audio, text_bf, t_w_ref[...], t_m1_ref[...], t_m2_ref[...],
                    t_slab_ref[...], H=H, Hp=Hp)
    out_ref[...] = jnp.minimum(t_out, a_out)          # fusion_head_output_type 'min'


def fusion_kernel_packed(text_ref, audio_ref, w_ref, m1_ref, m2_ref,
                         a_slab_ref, t_slab_ref, out_ref, *, H, Hp):
    """Block-diagonal packing of both branches (v6e / v7x: 256-wide MXUs).

    LHS = [audio || text] (TB, 2Hp), RHS = blockdiag(Wa, Wt) (2Hp, 2Hp); the
    CBAM MLP dots are packed the same way.  The zero off-diagonal blocks add
    exact 0.0 to the f32 accumulator, so numerics match the unpacked path.
    """
    text_bf = text_ref[...]
    audio_bf = audio_ref[...]
    text = text_bf.astype(jnp.float32)
    audio = audio_bf.astype(jnp.float32)
    a_slab = a_slab_ref[...]
    t_slab = t_slab_ref[...]

    lhs = jnp.concatenate([audio_bf, text_bf], axis=-1)            # (TB, 2Hp) bf16
    resid = jnp.concatenate([text, audio], axis=-1)                # (TB, 2Hp) f32
    bias = jnp.concatenate([a_slab[0:1, :], t_slab[0:1, :]], axis=-1)
    y = (jnp.dot(lhs, w_ref[...], preferred_element_type=jnp.float32)
         + bias + resid)

    y_a = _layernorm(y[:, :Hp], a_slab, H)         # audio branch (query=text)
    y_t = _layernorm(y[:, Hp:], t_slab, H)         # text branch  (query=audio)

    z = jnp.concatenate([y_a, y_t], axis=-1).astype(jnp.bfloat16)
    h = jax.nn.relu(jnp.dot(z, m1_ref[...], preferred_element_type=jnp.float32))
    ca = 2.0 * jax.nn.sigmoid(jnp.dot(h.astype(jnp.bfloat16), m2_ref[...],
                                      preferred_element_type=jnp.float32))
    y_a = y_a * ca[:, :Hp]
    y_t = y_t * ca[:, Hp:]

    a_out = _spatial_conv_gate(y_a, a_slab, Hp)
    t_out = _spatial_conv_gate(y_t, t_slab, Hp)
    out_ref[...] = jnp.minimum(t_out, a_out)


# ---------------------------------------------------------------------------
# Host-side parameter packing (algebraic fusion + lane-dense padding)
# ---------------------------------------------------------------------------
def make_params(key, H, reduction=16):
    """Deterministic synthetic parameters for one branch (PyTorch shapes)."""
    ks = jax.random.split(key, 9)
    r = max(H // reduction, 1)
    return {
        "wv": 0.1 * jax.random.normal(ks[0], (H, H), jnp.float32),      # (out,in)
        "bv": 0.1 * jax.random.normal(ks[1], (H,), jnp.float32),
        "wo": 0.1 * jax.random.normal(ks[2], (H, H), jnp.float32),
        "bo": 0.1 * jax.random.normal(ks[3], (H,), jnp.float32),
        "lin_w": 0.1 * jax.random.normal(ks[4], (H, H), jnp.float32),
        "lin_b": 0.1 * jax.random.normal(ks[5], (H,), jnp.float32),
        "ln_g": jnp.ones((H,), jnp.float32),
        "ln_b": jnp.zeros((H,), jnp.float32),
        "mlp_w1": 0.1 * jax.random.normal(ks[6], (r, H), jnp.float32),  # (out,in)
        "mlp_w2": 0.1 * jax.random.normal(ks[7], (H, r), jnp.float32),  # (out,in)
        "conv_w": 0.1 * jax.random.normal(ks[8], (1, 2, 7), jnp.float32),
    }


def pack_branch(p, H, Hp, rp):
    """Fuse v/out/linear projections, pad lane-dense, build the (16,Hp) slab."""
    dot_hi = lambda a, b: jnp.dot(a, b, precision="highest")   # f32 host fusion
    # NOTE: for real (non-0.1-scaled) weights verify the fused product's dynamic
    # range is still well represented in bf16 before shipping.
    w_fused = dot_hi(dot_hi(p["wv"].T, p["wo"].T), p["lin_w"].T)               # (H,H)
    b_fused = dot_hi(dot_hi(p["bv"], p["wo"].T) + p["bo"], p["lin_w"].T) + p["lin_b"]

    w_fused = _pad2(w_fused, Hp, Hp).astype(jnp.bfloat16)
    m1 = _pad2(p["mlp_w1"].T, Hp, rp).astype(jnp.bfloat16)      # (H,r) -> (Hp,rp)
    m2 = _pad2(p["mlp_w2"].T, rp, Hp).astype(jnp.bfloat16)      # (r,H) -> (rp,Hp)

    wk = p["conv_w"][0, 0] + p["conv_w"][0, 1]                  # (7,) summed taps
    j = jnp.arange(Hp)
    slab = jnp.zeros((16, Hp), jnp.float32)
    slab = slab.at[0, :H].set(b_fused)
    slab = slab.at[1, :H].set(p["ln_g"])
    slab = slab.at[2, :H].set(p["ln_b"])
    slab = slab.at[3, :H].set(1.0)                              # LN real-lane mask
    for k in range(7):
        d = k - 3
        valid = ((j + d >= 0) & (j + d < H)).astype(jnp.float32)  # conv zero-pad baked
        slab = slab.at[4 + k, :].set(wk[k] * valid)
    return {"w": w_fused, "m1": m1, "m2": m2, "slab": slab}


# ---------------------------------------------------------------------------
# Wrapper
# ---------------------------------------------------------------------------
def cross_modal_fusion(text_feat, audio_feat, audio_params, text_params,
                       force_packed=None):
    B, H = text_feat.shape
    Hp = _round_up(H, _LANE)
    r = audio_params["mlp_w1"].shape[0]
    rp = _round_up(r, _LANE)

    # Batch tile: up to 256 rows; guarantee >= 2 grid steps when B allows so
    # v7x's second TensorCore gets work (harmless on 1-TC chips).
    TB = min(256, _round_up(B, _ROW))
    if B > _ROW and _round_up(B, TB) // TB < 2:
        TB = _round_up(-(-B // 2), _ROW)
    Bp = _round_up(B, TB)
    grid = (Bp // TB,)

    # Activations DMA'd as bf16 (HBM-bound at small/moderate H); padded lanes
    # are exact zeros.  In-kernel elementwise/LN math is upcast to f32.
    text_p = jnp.pad(text_feat, ((0, Bp - B), (0, Hp - H))).astype(jnp.bfloat16)
    audio_p = jnp.pad(audio_feat, ((0, Bp - B), (0, Hp - H))).astype(jnp.bfloat16)

    a = pack_branch(audio_params, H, Hp, rp)
    t = pack_branch(text_params, H, Hp, rp)

    packed = force_packed if force_packed is not None else (
        Hp == _LANE and rp == _LANE and _mxu_is_256_wide())

    act_spec = pl.BlockSpec((TB, Hp), lambda b: (b, 0))
    const = lambda shape: pl.BlockSpec(shape, lambda b: (0, 0))   # VMEM-resident

    if packed:
        w_bd = _blockdiag(a["w"], t["w"])          # (2Hp, 2Hp) bf16
        m1_bd = _blockdiag(a["m1"], t["m1"])       # (2Hp, 2rp) bf16
        m2_bd = _blockdiag(a["m2"], t["m2"])       # (2rp, 2Hp) bf16
        weights = [w_bd, m1_bd, m2_bd, a["slab"], t["slab"]]
        w_specs = [const(w_bd.shape), const(m1_bd.shape), const(m2_bd.shape),
                   const((16, Hp)), const((16, Hp))]
        kernel = functools.partial(fusion_kernel_packed, H=H, Hp=Hp)
    else:
        weights = [a["w"], a["m1"], a["m2"], a["slab"],
                   t["w"], t["m1"], t["m2"], t["slab"]]
        w_specs = [const((Hp, Hp)), const((Hp, rp)), const((rp, Hp)),
                   const((16, Hp))] * 2
        kernel = functools.partial(fusion_kernel, H=H, Hp=Hp)

    # TODO(synk): for H >= ~2048 on v7x, K-tile the fused weights over an
    # 'arbitrary' grid axis instead of keeping both (Hp,Hp) blocks resident.

    # Explicit scoped-VMEM limit: double-buffered activation/output blocks +
    # the (conservatively double-buffered) resident weights + headroom.
    act_bytes = 2 * (2 * TB * Hp * 2 + TB * Hp * 4)
    w_bytes = 2 * sum(int(w.size) * w.dtype.itemsize for w in weights)
    vmem_limit = int(min(96 << 20, act_bytes + w_bytes + (16 << 20)))

    out = pl.pallas_call(
        kernel,
        out_shape=jax.ShapeDtypeStruct((Bp, Hp), jnp.float32),
        grid=grid,
        in_specs=[act_spec, act_spec] + w_specs,
        out_specs=act_spec,
        compiler_params=pltpu.CompilerParams(
            dimension_semantics=("parallel",),       # batch sharded across TCs
            vmem_limit_bytes=vmem_limit),
    )(text_p, audio_p, *weights)
    return out[:B, :H]


# ---------------------------------------------------------------------------
# Pure-JAX reference (mirrors the PyTorch forward, eval mode, f32)
# ---------------------------------------------------------------------------
def reference(text_feat, audio_feat, audio_params, text_params):
    def branch(query, kv, p):
        H = query.shape[-1]
        v = kv @ p["wv"].T + p["bv"]
        attn = v @ p["wo"].T + p["bo"]
        y = attn @ p["lin_w"].T + p["lin_b"] + query
        mu = y.mean(-1, keepdims=True)
        var = ((y - mu) ** 2).mean(-1, keepdims=True)
        y = (y - mu) / jnp.sqrt(var + LN_EPS) * p["ln_g"] + p["ln_b"]
        ca = 2.0 * jax.nn.sigmoid(jax.nn.relu(y @ p["mlp_w1"].T) @ p["mlp_w2"].T)
        y = y * ca
        xp = jnp.pad(y, ((0, 0), (3, 3)))
        wk = p["conv_w"][0, 0] + p["conv_w"][0, 1]
        conv = sum(wk[k] * xp[:, k:k + H] for k in range(7))
        return y * jax.nn.sigmoid(conv)

    a = branch(text_feat, audio_feat, audio_params)
    t = branch(audio_feat, text_feat, text_params)
    return jnp.minimum(t, a)


if __name__ == "__main__":
    B, H = 2, 32
    key = jax.random.PRNGKey(0)
    k_text, k_audio, k_pa, k_pt = jax.random.split(key, 4)

    text_feat = jax.random.normal(k_text, (B, H), jnp.float32)
    audio_feat = jax.random.normal(k_audio, (B, H), jnp.float32)
    audio_params = make_params(k_pa, H)
    text_params = make_params(k_pt, H)

    out = cross_modal_fusion(text_feat, audio_feat, audio_params, text_params)
    out = jax.block_until_ready(out)

    ref = reference(text_feat, audio_feat, audio_params, text_params)
    assert out.shape == (B, H)
    # bf16 activations + bf16 MXU weights vs f32 reference (observed err ~1e-2).
    assert jnp.allclose(out, ref, atol=3e-2, rtol=3e-2), "mismatch vs JAX reference"
    print("KERNEL_OK")
</pallas_src>

<mosaic_0001>
module attributes {stable_mosaic.version = 11 : i64} {
  func.func @fusion_kernel(%arg0: i32, %arg1: memref<16x128xbf16, #tpu.memory_space<vmem>>, %arg2: memref<16x128xbf16, #tpu.memory_space<vmem>>, %arg3: memref<128x128xbf16, #tpu.memory_space<vmem>>, %arg4: memref<128x128xbf16, #tpu.memory_space<vmem>>, %arg5: memref<128x128xbf16, #tpu.memory_space<vmem>>, %arg6: memref<16x128xf32, #tpu.memory_space<vmem>>, %arg7: memref<128x128xbf16, #tpu.memory_space<vmem>>, %arg8: memref<128x128xbf16, #tpu.memory_space<vmem>>, %arg9: memref<128x128xbf16, #tpu.memory_space<vmem>>, %arg10: memref<16x128xf32, #tpu.memory_space<vmem>>, %arg11: memref<16x128xf32, #tpu.memory_space<vmem>>) attributes {dimension_semantics = [#tpu.dimension_semantics<parallel>], iteration_bounds = array<i64: 1>, scalar_prefetch = 0 : i64, scratch_operands = 0 : i64, tpu.core_type = #tpu.core_type<tc>, window_params = [{transform_indices = @transform_0, window_bounds = array<i64: 16, 128>}, {transform_indices = @transform_1, window_bounds = array<i64: 16, 128>}, {pipeline_mode = #tpu.pipeline_mode<synchronous>, transform_indices = @transform_2, window_bounds = array<i64: 128, 128>}, {pipeline_mode = #tpu.pipeline_mode<synchronous>, transform_indices = @transform_3, window_bounds = array<i64: 128, 128>}, {pipeline_mode = #tpu.pipeline_mode<synchronous>, transform_indices = @transform_4, window_bounds = array<i64: 128, 128>}, {pipeline_mode = #tpu.pipeline_mode<synchronous>, transform_indices = @transform_5, window_bounds = array<i64: 16, 128>}, {pipeline_mode = #tpu.pipeline_mode<synchronous>, transform_indices = @transform_6, window_bounds = array<i64: 128, 128>}, {pipeline_mode = #tpu.pipeline_mode<synchronous>, transform_indices = @transform_7, window_bounds = array<i64: 128, 128>}, {pipeline_mode = #tpu.pipeline_mode<synchronous>, transform_indices = @transform_8, window_bounds = array<i64: 128, 128>}, {pipeline_mode = #tpu.pipeline_mode<synchronous>, transform_indices = @transform_9, window_bounds = array<i64: 16, 128>}, {transform_indices = @transform_10, window_bounds = array<i64: 16, 128>}]} {
    %c0 = arith.constant 0 : index
    %c0_0 = arith.constant 0 : index
    %0 = vector.load %arg1[%c0, %c0_0] : memref<16x128xbf16, #tpu.memory_space<vmem>>, vector<16x128xbf16>
    %c0_1 = arith.constant 0 : index
    %c0_2 = arith.constant 0 : index
    %1 = vector.load %arg2[%c0_1, %c0_2] : memref<16x128xbf16, #tpu.memory_space<vmem>>, vector<16x128xbf16>
    %2 = arith.extf %0 : vector<16x128xbf16> to vector<16x128xf32>
    %3 = arith.extf %1 : vector<16x128xbf16> to vector<16x128xf32>
    %c0_3 = arith.constant 0 : index
    %c0_4 = arith.constant 0 : index
    %4 = vector.load %arg3[%c0_3, %c0_4] : memref<128x128xbf16, #tpu.memory_space<vmem>>, vector<128x128xbf16>
    %c0_5 = arith.constant 0 : index
    %c0_6 = arith.constant 0 : index
    %5 = vector.load %arg4[%c0_5, %c0_6] : memref<128x128xbf16, #tpu.memory_space<vmem>>, vector<128x128xbf16>
    %c0_7 = arith.constant 0 : index
    %c0_8 = arith.constant 0 : index
    %6 = vector.load %arg5[%c0_7, %c0_8] : memref<128x128xbf16, #tpu.memory_space<vmem>>, vector<128x128xbf16>
    %c0_9 = arith.constant 0 : index
    %c0_10 = arith.constant 0 : index
    %7 = vector.load %arg6[%c0_9, %c0_10] : memref<16x128xf32, #tpu.memory_space<vmem>>, vector<16x128xf32>
    %cst = arith.constant dense<0.000000e+00> : vector<16x128xf32>
    %8 = tpu.matmul %1, %4, %cst {dimension_numbers = #tpu.dot_dimension_numbers<[1], [0], [0], [1], [0, 0, 1, 1], [], []>} : vector<16x128xbf16>, vector<128x128xbf16>, vector<16x128xf32> -> vector<16x128xf32>
    %9 = vector.extract_strided_slice %7 {offsets = [0, 0], sizes = [1, 128], strides = [1, 1]} : vector<16x128xf32> to vector<1x128xf32>
    %10 = vector.broadcast %9 : vector<1x128xf32> to vector<16x128xf32>
    %11 = arith.addf %8, %10 : vector<16x128xf32>
    %12 = arith.addf %11, %2 : vector<16x128xf32>
    %cst_11 = arith.constant dense<0.000000e+00> : vector<16xf32>
    %13 = vector.multi_reduction <add>, %12, %cst_11 [1] : vector<16x128xf32> to vector<16xf32>
    %14 = vector.shape_cast %13 : vector<16xf32> to vector<16x1xf32>
    %cst_12 = arith.constant 3.125000e-02 : f32
    %15 = vector.broadcast %cst_12 : f32 to vector<16x1xf32>
    %16 = arith.mulf %14, %15 : vector<16x1xf32>
    %17 = vector.broadcast %16 : vector<16x1xf32> to vector<16x128xf32>
    %18 = arith.subf %12, %17 : vector<16x128xf32>
    %19 = vector.extract_strided_slice %7 {offsets = [3, 0], sizes = [1, 128], strides = [1, 1]} : vector<16x128xf32> to vector<1x128xf32>
    %20 = vector.broadcast %19 : vector<1x128xf32> to vector<16x128xf32>
    %21 = arith.mulf %18, %20 : vector<16x128xf32>
    %22 = arith.mulf %21, %21 : vector<16x128xf32>
    %cst_13 = arith.constant dense<0.000000e+00> : vector<16xf32>
    %23 = vector.multi_reduction <add>, %22, %cst_13 [1] : vector<16x128xf32> to vector<16xf32>
    %24 = vector.shape_cast %23 : vector<16xf32> to vector<16x1xf32>
    %cst_14 = arith.constant 3.125000e-02 : f32
    %25 = vector.broadcast %cst_14 : f32 to vector<16x1xf32>
    %26 = arith.mulf %24, %25 : vector<16x1xf32>
    %cst_15 = arith.constant 9.99999974E-6 : f32
    %27 = vector.broadcast %cst_15 : f32 to vector<16x1xf32>
    %28 = arith.addf %26, %27 : vector<16x1xf32>
    %29 = math.rsqrt %28 : vector<16x1xf32>
    %30 = vector.broadcast %29 : vector<16x1xf32> to vector<16x128xf32>
    %31 = arith.mulf %21, %30 : vector<16x128xf32>
    %32 = vector.extract_strided_slice %7 {offsets = [1, 0], sizes = [1, 128], strides = [1, 1]} : vector<16x128xf32> to vector<1x128xf32>
    %33 = vector.broadcast %32 : vector<1x128xf32> to vector<16x128xf32>
    %34 = arith.mulf %31, %33 : vector<16x128xf32>
    %35 = vector.extract_strided_slice %7 {offsets = [2, 0], sizes = [1, 128], strides = [1, 1]} : vector<16x128xf32> to vector<1x128xf32>
    %36 = vector.broadcast %35 : vector<1x128xf32> to vector<16x128xf32>
    %37 = arith.addf %34, %36 : vector<16x128xf32>
    %38 = arith.truncf %37 : vector<16x128xf32> to vector<16x128xbf16>
    %cst_16 = arith.constant dense<0.000000e+00> : vector<16x128xf32>
    %39 = tpu.matmul %38, %5, %cst_16 {dimension_numbers = #tpu.dot_dimension_numbers<[1], [0], [0], [1], [0, 0, 1, 1], [], []>} : vector<16x128xbf16>, vector<128x128xbf16>, vector<16x128xf32> -> vector<16x128xf32>
    %cst_17 = arith.constant 0.000000e+00 : f32
    %40 = vector.broadcast %cst_17 : f32 to vector<16x128xf32>
    %41 = arith.maximumf %39, %40 : vector<16x128xf32>
    %42 = arith.truncf %41 : vector<16x128xf32> to vector<16x128xbf16>
    %cst_18 = arith.constant dense<0.000000e+00> : vector<16x128xf32>
    %43 = tpu.matmul %42, %6, %cst_18 {dimension_numbers = #tpu.dot_dimension_numbers<[1], [0], [0], [1], [0, 0, 1, 1], [], []>} : vector<16x128xbf16>, vector<128x128xbf16>, vector<16x128xf32> -> vector<16x128xf32>
    %44 = arith.negf %43 : vector<16x128xf32>
    %45 = math.exp %44 : vector<16x128xf32>
    %cst_19 = arith.constant 1.000000e+00 : f32
    %46 = vector.broadcast %cst_19 : f32 to vector<16x128xf32>
    %47 = arith.addf %46, %45 : vector<16x128xf32>
    %48 = arith.divf %46, %47 : vector<16x128xf32>
    %cst_20 = arith.constant 2.000000e+00 : f32
    %49 = vector.broadcast %cst_20 : f32 to vector<16x128xf32>
    %50 = arith.mulf %49, %48 : vector<16x128xf32>
    %51 = arith.mulf %37, %50 : vector<16x128xf32>
    %52 = vector.extract_strided_slice %7 {offsets = [7, 0], sizes = [1, 128], strides = [1, 1]} : vector<16x128xf32> to vector<1x128xf32>
    %53 = vector.broadcast %52 : vector<1x128xf32> to vector<16x128xf32>
    %54 = arith.mulf %53, %51 : vector<16x128xf32>
    %c3_i32 = arith.constant 3 : i32
    %55 = tpu.dynamic_rotate %51 by %c3_i32 dim 1 : vector<16x128xf32>, i32 -> vector<16x128xf32>
    %56 = vector.extract_strided_slice %7 {offsets = [4, 0], sizes = [1, 128], strides = [1, 1]} : vector<16x128xf32> to vector<1x128xf32>
    %57 = vector.broadcast %56 : vector<1x128xf32> to vector<16x128xf32>
    %58 = arith.mulf %57, %55 : vector<16x128xf32>
    %59 = arith.addf %54, %58 : vector<16x128xf32>
    %c2_i32 = arith.constant 2 : i32
    %60 = tpu.dynamic_rotate %51 by %c2_i32 dim 1 : vector<16x128xf32>, i32 -> vector<16x128xf32>
    %61 = vector.extract_strided_slice %7 {offsets = [5, 0], sizes = [1, 128], strides = [1, 1]} : vector<16x128xf32> to vector<1x128xf32>
    %62 = vector.broadcast %61 : vector<1x128xf32> to vector<16x128xf32>
    %63 = arith.mulf %62, %60 : vector<16x128xf32>
    %64 = arith.addf %59, %63 : vector<16x128xf32>
    %c1_i32 = arith.constant 1 : i32
    %65 = tpu.dynamic_rotate %51 by %c1_i32 dim 1 : vector<16x128xf32>, i32 -> vector<16x128xf32>
    %66 = vector.extract_strided_slice %7 {offsets = [6, 0], sizes = [1, 128], strides = [1, 1]} : vector<16x128xf32> to vector<1x128xf32>
    %67 = vector.broadcast %66 : vector<1x128xf32> to vector<16x128xf32>
    %68 = arith.mulf %67, %65 : vector<16x128xf32>
    %69 = arith.addf %64, %68 : vector<16x128xf32>
    %c127_i32 = arith.constant 127 : i32
    %70 = tpu.dynamic_rotate %51 by %c127_i32 dim 1 : vector<16x128xf32>, i32 -> vector<16x128xf32>
    %71 = vector.extract_strided_slice %7 {offsets = [8, 0], sizes = [1, 128], strides = [1, 1]} : vector<16x128xf32> to vector<1x128xf32>
    %72 = vector.broadcast %71 : vector<1x128xf32> to vector<16x128xf32>
    %73 = arith.mulf %72, %70 : vector<16x128xf32>
    %74 = arith.addf %69, %73 : vector<16x128xf32>
    %c126_i32 = arith.constant 126 : i32
    %75 = tpu.dynamic_rotate %51 by %c126_i32 dim 1 : vector<16x128xf32>, i32 -> vector<16x128xf32>
    %76 = vector.extract_strided_slice %7 {offsets = [9, 0], sizes = [1, 128], strides = [1, 1]} : vector<16x128xf32> to vector<1x128xf32>
    %77 = vector.broadcast %76 : vector<1x128xf32> to vector<16x128xf32>
    %78 = arith.mulf %77, %75 : vector<16x128xf32>
    %79 = arith.addf %74, %78 : vector<16x128xf32>
    %c125_i32 = arith.constant 125 : i32
    %80 = tpu.dynamic_rotate %51 by %c125_i32 dim 1 : vector<16x128xf32>, i32 -> vector<16x128xf32>
    %81 = vector.extract_strided_slice %7 {offsets = [10, 0], sizes = [1, 128], strides = [1, 1]} : vector<16x128xf32> to vector<1x128xf32>
    %82 = vector.broadcast %81 : vector<1x128xf32> to vector<16x128xf32>
    %83 = arith.mulf %82, %80 : vector<16x128xf32>
    %84 = arith.addf %79, %83 : vector<16x128xf32>
    %85 = arith.negf %84 : vector<16x128xf32>
    %86 = math.exp %85 : vector<16x128xf32>
    %cst_21 = arith.constant 1.000000e+00 : f32
    %87 = vector.broadcast %cst_21 : f32 to vector<16x128xf32>
    %88 = arith.addf %87, %86 : vector<16x128xf32>
    %89 = arith.divf %87, %88 : vector<16x128xf32>
    %90 = arith.mulf %51, %89 : vector<16x128xf32>
    %c0_22 = arith.constant 0 : index
    %c0_23 = arith.constant 0 : index
    %91 = vector.load %arg7[%c0_22, %c0_23] : memref<128x128xbf16, #tpu.memory_space<vmem>>, vector<128x128xbf16>
    %c0_24 = arith.constant 0 : index
    %c0_25 = arith.constant 0 : index
    %92 = vector.load %arg8[%c0_24, %c0_25] : memref<128x128xbf16, #tpu.memory_space<vmem>>, vector<128x128xbf16>
    %c0_26 = arith.constant 0 : index
    %c0_27 = arith.constant 0 : index
    %93 = vector.load %arg9[%c0_26, %c0_27] : memref<128x128xbf16, #tpu.memory_space<vmem>>, vector<128x128xbf16>
    %c0_28 = arith.constant 0 : index
    %c0_29 = arith.constant 0 : index
    %94 = vector.load %arg10[%c0_28, %c0_29] : memref<16x128xf32, #tpu.memory_space<vmem>>, vector<16x128xf32>
    %cst_30 = arith.constant dense<0.000000e+00> : vector<16x128xf32>
    %95 = tpu.matmul %0, %91, %cst_30 {dimension_numbers = #tpu.dot_dimension_numbers<[1], [0], [0], [1], [0, 0, 1, 1], [], []>} : vector<16x128xbf16>, vector<128x128xbf16>, vector<16x128xf32> -> vector<16x128xf32>
    %96 = vector.extract_strided_slice %94 {offsets = [0, 0], sizes = [1, 128], strides = [1, 1]} : vector<16x128xf32> to vector<1x128xf32>
    %97 = vector.broadcast %96 : vector<1x128xf32> to vector<16x128xf32>
    %98 = arith.addf %95, %97 : vector<16x128xf32>
    %99 = arith.addf %98, %3 : vector<16x128xf32>
    %cst_31 = arith.constant dense<0.000000e+00> : vector<16xf32>
    %100 = vector.multi_reduction <add>, %99, %cst_31 [1] : vector<16x128xf32> to vector<16xf32>
    %101 = vector.shape_cast %100 : vector<16xf32> to vector<16x1xf32>
    %cst_32 = arith.constant 3.125000e-02 : f32
    %102 = vector.broadcast %cst_32 : f32 to vector<16x1xf32>
    %103 = arith.mulf %101, %102 : vector<16x1xf32>
    %104 = vector.broadcast %103 : vector<16x1xf32> to vector<16x128xf32>
    %105 = arith.subf %99, %104 : vector<16x128xf32>
    %106 = vector.extract_strided_slice %94 {offsets = [3, 0], sizes = [1, 128], strides = [1, 1]} : vector<16x128xf32> to vector<1x128xf32>
    %107 = vector.broadcast %106 : vector<1x128xf32> to vector<16x128xf32>
    %108 = arith.mulf %105, %107 : vector<16x128xf32>
    %109 = arith.mulf %108, %108 : vector<16x128xf32>
    %cst_33 = arith.constant dense<0.000000e+00> : vector<16xf32>
    %110 = vector.multi_reduction <add>, %109, %cst_33 [1] : vector<16x128xf32> to vector<16xf32>
    %111 = vector.shape_cast %110 : vector<16xf32> to vector<16x1xf32>
    %cst_34 = arith.constant 3.125000e-02 : f32
    %112 = vector.broadcast %cst_34 : f32 to vector<16x1xf32>
    %113 = arith.mulf %111, %112 : vector<16x1xf32>
    %cst_35 = arith.constant 9.99999974E-6 : f32
    %114 = vector.broadcast %cst_35 : f32 to vector<16x1xf32>
    %115 = arith.addf %113, %114 : vector<16x1xf32>
    %116 = math.rsqrt %115 : vector<16x1xf32>
    %117 = vector.broadcast %116 : vector<16x1xf32> to vector<16x128xf32>
    %118 = arith.mulf %108, %117 : vector<16x128xf32>
    %119 = vector.extract_strided_slice %94 {offsets = [1, 0], sizes = [1, 128], strides = [1, 1]} : vector<16x128xf32> to vector<1x128xf32>
    %120 = vector.broadcast %119 : vector<1x128xf32> to vector<16x128xf32>
    %121 = arith.mulf %118, %120 : vector<16x128xf32>
    %122 = vector.extract_strided_slice %94 {offsets = [2, 0], sizes = [1, 128], strides = [1, 1]} : vector<16x128xf32> to vector<1x128xf32>
    %123 = vector.broadcast %122 : vector<1x128xf32> to vector<16x128xf32>
    %124 = arith.addf %121, %123 : vector<16x128xf32>
    %125 = arith.truncf %124 : vector<16x128xf32> to vector<16x128xbf16>
    %cst_36 = arith.constant dense<0.000000e+00> : vector<16x128xf32>
    %126 = tpu.matmul %125, %92, %cst_36 {dimension_numbers = #tpu.dot_dimension_numbers<[1], [0], [0], [1], [0, 0, 1, 1], [], []>} : vector<16x128xbf16>, vector<128x128xbf16>, vector<16x128xf32> -> vector<16x128xf32>
    %cst_37 = arith.constant 0.000000e+00 : f32
    %127 = vector.broadcast %cst_37 : f32 to vector<16x128xf32>
    %128 = arith.maximumf %126, %127 : vector<16x128xf32>
    %129 = arith.truncf %128 : vector<16x128xf32> to vector<16x128xbf16>
    %cst_38 = arith.constant dense<0.000000e+00> : vector<16x128xf32>
    %130 = tpu.matmul %129, %93, %cst_38 {dimension_numbers = #tpu.dot_dimension_numbers<[1], [0], [0], [1], [0, 0, 1, 1], [], []>} : vector<16x128xbf16>, vector<128x128xbf16>, vector<16x128xf32> -> vector<16x128xf32>
    %131 = arith.negf %130 : vector<16x128xf32>
    %132 = math.exp %131 : vector<16x128xf32>
    %cst_39 = arith.constant 1.000000e+00 : f32
    %133 = vector.broadcast %cst_39 : f32 to vector<16x128xf32>
    %134 = arith.addf %133, %132 : vector<16x128xf32>
    %135 = arith.divf %133, %134 : vector<16x128xf32>
    %cst_40 = arith.constant 2.000000e+00 : f32
    %136 = vector.broadcast %cst_40 : f32 to vector<16x128xf32>
    %137 = arith.mulf %136, %135 : vector<16x128xf32>
    %138 = arith.mulf %124, %137 : vector<16x128xf32>
    %139 = vector.extract_strided_slice %94 {offsets = [7, 0], sizes = [1, 128], strides = [1, 1]} : vector<16x128xf32> to vector<1x128xf32>
    %140 = vector.broadcast %139 : vector<1x128xf32> to vector<16x128xf32>
    %141 = arith.mulf %140, %138 : vector<16x128xf32>
    %c3_i32_41 = arith.constant 3 : i32
    %142 = tpu.dynamic_rotate %138 by %c3_i32_41 dim 1 : vector<16x128xf32>, i32 -> vector<16x128xf32>
    %143 = vector.extract_strided_slice %94 {offsets = [4, 0], sizes = [1, 128], strides = [1, 1]} : vector<16x128xf32> to vector<1x128xf32>
    %144 = vector.broadcast %143 : vector<1x128xf32> to vector<16x128xf32>
    %145 = arith.mulf %144, %142 : vector<16x128xf32>
    %146 = arith.addf %141, %145 : vector<16x128xf32>
    %c2_i32_42 = arith.constant 2 : i32
    %147 = tpu.dynamic_rotate %138 by %c2_i32_42 dim 1 : vector<16x128xf32>, i32 -> vector<16x128xf32>
    %148 = vector.extract_strided_slice %94 {offsets = [5, 0], sizes = [1, 128], strides = [1, 1]} : vector<16x128xf32> to vector<1x128xf32>
    %149 = vector.broadcast %148 : vector<1x128xf32> to vector<16x128xf32>
    %150 = arith.mulf %149, %147 : vector<16x128xf32>
    %151 = arith.addf %146, %150 : vector<16x128xf32>
    %c1_i32_43 = arith.constant 1 : i32
    %152 = tpu.dynamic_rotate %138 by %c1_i32_43 dim 1 : vector<16x128xf32>, i32 -> vector<16x128xf32>
    %153 = vector.extract_strided_slice %94 {offsets = [6, 0], sizes = [1, 128], strides = [1, 1]} : vector<16x128xf32> to vector<1x128xf32>
    %154 = vector.broadcast %153 : vector<1x128xf32> to vector<16x128xf32>
    %155 = arith.mulf %154, %152 : vector<16x128xf32>
    %156 = arith.addf %151, %155 : vector<16x128xf32>
    %c127_i32_44 = arith.constant 127 : i32
    %157 = tpu.dynamic_rotate %138 by %c127_i32_44 dim 1 : vector<16x128xf32>, i32 -> vector<16x128xf32>
    %158 = vector.extract_strided_slice %94 {offsets = [8, 0], sizes = [1, 128], strides = [1, 1]} : vector<16x128xf32> to vector<1x128xf32>
    %159 = vector.broadcast %158 : vector<1x128xf32> to vector<16x128xf32>
    %160 = arith.mulf %159, %157 : vector<16x128xf32>
    %161 = arith.addf %156, %160 : vector<16x128xf32>
    %c126_i32_45 = arith.constant 126 : i32
    %162 = tpu.dynamic_rotate %138 by %c126_i32_45 dim 1 : vector<16x128xf32>, i32 -> vector<16x128xf32>
    %163 = vector.extract_strided_slice %94 {offsets = [9, 0], sizes = [1, 128], strides = [1, 1]} : vector<16x128xf32> to vector<1x128xf32>
    %164 = vector.broadcast %163 : vector<1x128xf32> to vector<16x128xf32>
    %165 = arith.mulf %164, %162 : vector<16x128xf32>
    %166 = arith.addf %161, %165 : vector<16x128xf32>
    %c125_i32_46 = arith.constant 125 : i32
    %167 = tpu.dynamic_rotate %138 by %c125_i32_46 dim 1 : vector<16x128xf32>, i32 -> vector<16x128xf32>
    %168 = vector.extract_strided_slice %94 {offsets = [10, 0], sizes = [1, 128], strides = [1, 1]} : vector<16x128xf32> to vector<1x128xf32>
    %169 = vector.broadcast %168 : vector<1x128xf32> to vector<16x128xf32>
    %170 = arith.mulf %169, %167 : vector<16x128xf32>
    %171 = arith.addf %166, %170 : vector<16x128xf32>
    %172 = arith.negf %171 : vector<16x128xf32>
    %173 = math.exp %172 : vector<16x128xf32>
    %cst_47 = arith.constant 1.000000e+00 : f32
    %174 = vector.broadcast %cst_47 : f32 to vector<16x128xf32>
    %175 = arith.addf %174, %173 : vector<16x128xf32>
    %176 = arith.divf %174, %175 : vector<16x128xf32>
    %177 = arith.mulf %138, %176 : vector<16x128xf32>
    %178 = arith.minimumf %177, %90 : vector<16x128xf32>
    %c0_48 = arith.constant 0 : index
    %c0_49 = arith.constant 0 : index
    %179 = vector.load %arg11[%c0_48, %c0_49] : memref<16x128xf32, #tpu.memory_space<vmem>>, vector<16x128xf32>
    tpu.vector_store %arg11[%c0_48, %c0_49], %178 {strides = array<i32>} : memref<16x128xf32, #tpu.memory_space<vmem>>, vector<16x128xf32>,
    return
  }
  func.func @transform_0(%arg0: i32) -> (i32, i32) {
    %c0_i32 = arith.constant 0 : i32
    %c0_i32_0 = arith.constant 0 : i32
    return %arg0, %c0_i32 : i32, i32
  }
  func.func @transform_1(%arg0: i32) -> (i32, i32) {
    %c0_i32 = arith.constant 0 : i32
    %c0_i32_0 = arith.constant 0 : i32
    return %arg0, %c0_i32 : i32, i32
  }
  func.func @transform_2(%arg0: i32) -> (i32, i32) {
    %c0_i32 = arith.constant 0 : i32
    %c0_i32_0 = arith.constant 0 : i32
    %c0_i32_1 = arith.constant 0 : i32
    return %c0_i32, %c0_i32_0 : i32, i32
  }
  func.func @transform_3(%arg0: i32) -> (i32, i32) {
    %c0_i32 = arith.constant 0 : i32
    %c0_i32_0 = arith.constant 0 : i32
    %c0_i32_1 = arith.constant 0 : i32
    return %c0_i32, %c0_i32_0 : i32, i32
  }
  func.func @transform_4(%arg0: i32) -> (i32, i32) {
    %c0_i32 = arith.constant 0 : i32
    %c0_i32_0 = arith.constant 0 : i32
    %c0_i32_1 = arith.constant 0 : i32
    return %c0_i32, %c0_i32_0 : i32, i32
  }
  func.func @transform_5(%arg0: i32) -> (i32, i32) {
    %c0_i32 = arith.constant 0 : i32
    %c0_i32_0 = arith.constant 0 : i32
    %c0_i32_1 = arith.constant 0 : i32
    return %c0_i32, %c0_i32_0 : i32, i32
  }
  func.func @transform_6(%arg0: i32) -> (i32, i32) {
    %c0_i32 = arith.constant 0 : i32
    %c0_i32_0 = arith.constant 0 : i32
    %c0_i32_1 = arith.constant 0 : i32
    return %c0_i32, %c0_i32_0 : i32, i32
  }
  func.func @transform_7(%arg0: i32) -> (i32, i32) {
    %c0_i32 = arith.constant 0 : i32
    %c0_i32_0 = arith.constant 0 : i32
    %c0_i32_1 = arith.constant 0 : i32
    return %c0_i32, %c0_i32_0 : i32, i32
  }
  func.func @transform_8(%arg0: i32) -> (i32, i32) {
    %c0_i32 = arith.constant 0 : i32
    %c0_i32_0 = arith.constant 0 : i32
    %c0_i32_1 = arith.constant 0 : i32
    return %c0_i32, %c0_i32_0 : i32, i32
  }
  func.func @transform_9(%arg0: i32) -> (i32, i32) {
    %c0_i32 = arith.constant 0 : i32
    %c0_i32_0 = arith.constant 0 : i32
    %c0_i32_1 = arith.constant 0 : i32
    return %c0_i32, %c0_i32_0 : i32, i32
  }
  func.func @transform_10(%arg0: i32) -> (i32, i32) {
    %c0_i32 = arith.constant 0 : i32
    %c0_i32_0 = arith.constant 0 : i32
    return %arg0, %c0_i32 : i32, i32
  }
}

</mosaic_0001>

<llo_original>
// kernel: tpu_custom_call.1
$region0: #{tpu_custom_call.1}
  #allocation0 [shape = 'u32[]', space=smem, size = 0x4, offset = 0x4, fixed_abs, tag = 'smem constant byte address 0x4 - core index']
  #allocation1 [shape = 'u32[144,128]{1,0:T(1,128)}', space=vmem, size = 0x12000, scoped, tag = 'internal scratch']
  %s0 = inlined_call_operand.hbm [shape: bf16[16,128], index: 0, kind: input, shape index: {}]
  %s1 = inlined_call_operand.hbm [shape: bf16[16,128], index: 1, kind: input, shape index: {}]
  %s2 = inlined_call_operand.hbm [shape: bf16[128,128], index: 2, kind: input, shape index: {}]
  %s3 = inlined_call_operand.hbm [shape: bf16[128,128], index: 3, kind: input, shape index: {}]
  %s4 = inlined_call_operand.hbm [shape: bf16[128,128], index: 4, kind: input, shape index: {}]
  %s5 = inlined_call_operand.vmem [shape: f32[16,128], index: 5, kind: input, shape index: {}]
  %s6 = inlined_call_operand.hbm [shape: bf16[128,128], index: 6, kind: input, shape index: {}]
  %s7 = inlined_call_operand.hbm [shape: bf16[128,128], index: 7, kind: input, shape index: {}]
  %s8 = inlined_call_operand.hbm [shape: bf16[128,128], index: 8, kind: input, shape index: {}]
  %s9 = inlined_call_operand.vmem [shape: f32[16,128], index: 9, kind: input, shape index: {}]
  %s10 = inlined_call_operand.hbm [shape: f32[16,128], index: 10, kind: output, shape index: {}]
  %s11 = sld [smem:[#allocation0]]
  $region82: #{tpu_custom_call.1} parent=0
    _
  %s13 = ssub.s32 1, %s11
  %s14 = scalar_select 0, %s13, %s11
  $region1: #{tpu_custom_call.1} parent=0
    #allocation2 [shape = 'u8[4096]{0}', space=vmem, size = 0x1000, scoped, tag = 'input window, operand 0, single buffered']
    #allocation3 [shape = 's32[1]{0}', space=sflag, size = 0x4, scoped, tag = 'scoped memory for tpu_custom_call.1']
    #allocation4 [shape = 's32[1]{0}', space=sflag, size = 0x4, scoped, tag = 'scoped memory for tpu_custom_call.1']
    #allocation5 [shape = 'u8[4096]{0}', space=vmem, size = 0x1000, scoped, tag = 'input window, operand 1, single buffered']
    #allocation6 [shape = 's32[1]{0}', space=sflag, size = 0x4, scoped, tag = 'scoped memory for tpu_custom_call.1']
    #allocation7 [shape = 'u8[32768]{0}', space=vmem, size = 0x8000, scoped, tag = 'input window, operand 2, single buffered']
    #allocation8 [shape = 'u8[32768]{0}', space=vmem, size = 0x8000, scoped, tag = 'input window, operand 3, single buffered']
    #allocation9 [shape = 's32[1]{0}', space=sflag, size = 0x4, scoped, tag = 'scoped memory for tpu_custom_call.1']
    #allocation10 [shape = 'u8[32768]{0}', space=vmem, size = 0x8000, scoped, tag = 'input window, operand 4, single buffered']
    #allocation11 [shape = 'u8[32768]{0}', space=vmem, size = 0x8000, scoped, tag = 'input window, operand 6, single buffered']
    #allocation12 [shape = 's32[1]{0}', space=sflag, size = 0x4, scoped, tag = 'scoped memory for tpu_custom_call.1']
    #allocation13 [shape = 'u8[32768]{0}', space=vmem, size = 0x8000, scoped, tag = 'input window, operand 7, single buffered']
    #allocation14 [shape = 'u8[32768]{0}', space=vmem, size = 0x8000, scoped, tag = 'input window, operand 8, single buffered']
    #allocation15 [shape = 's32[1]{0}', space=sflag, size = 0x4, scoped, tag = 'scoped memory for tpu_custom_call.1']
    #allocation16 [shape = 'u8[8192]{0}', space=vmem, size = 0x2000, scoped, tag = 'output window, operand 0, single buffered']
    %15 = vsyncpa [#allocation3], 0
    %16 = vsyncpa [#allocation6], 0
    %17 = vsyncpa [#allocation9], 0
    %18 = vsyncpa [#allocation12], 0
    %19 = vsyncpa [#allocation15], 0
    %20 = vsyncpa [#allocation4], 0
    // Predicated region
    $region2: #{tpu_custom_call.1} parent=1 // pred_check
      _
    $region3: #{tpu_custom_call.1} parent=1 // pred_check_branch
      %22 = sbr.rel (0) target = $region5
    $region4: #{tpu_custom_call.1} parent=1 // pred_region
      %s24 = ssub.s32 128, 128
      %25 = vsyncadd [#allocation3], %s24
      %s26 = sshll.u32 [#allocation2], 4
      %s27 = int_to_ptr.vmem [resolvable:$true] %s26
      %32 = dma.hbm_to_vmem [thread:$0]  %s0, 128, %s27, [#allocation3], 64, 64, 4
    $region5: #{tpu_custom_call.1} parent=1 // pred_fallthru
      _
    // Predicated region
    $region6: #{tpu_custom_call.1} parent=1 // pred_check
      _
    $region7: #{tpu_custom_call.1} parent=1 // pred_check_branch
      %34 = sbr.rel (0) target = $region9
    $region8: #{tpu_custom_call.1} parent=1 // pred_region
      %s36 = ssub.s32 128, 128
      %37 = vsyncadd [#allocation6], %s36
      %s38 = sshll.u32 [#allocation5], 4
      %s39 = int_to_ptr.vmem [resolvable:$true] %s38
      %44 = dma.hbm_to_vmem [thread:$0]  %s1, 128, %s39, [#allocation6], 64, 64, 4
    $region9: #{tpu_custom_call.1} parent=1 // pred_fallthru
      _
    // Predicated region
    $region10: #{tpu_custom_call.1} parent=1 // pred_check
      _
    $region11: #{tpu_custom_call.1} parent=1 // pred_check_branch
      %46 = sbr.rel (0) target = $region13
    $region12: #{tpu_custom_call.1} parent=1 // pred_region
      %s48 = ssub.s32 1024, 1024
      %49 = vsyncadd [#allocation6], %s48
      %s50 = sshll.u32 [#allocation7], 4
      %s51 = int_to_ptr.vmem [resolvable:$true] %s50
      %56 = dma.hbm_to_vmem [thread:$0]  %s2, 1024, %s51, [#allocation6], 64, 64, 4
    $region13: #{tpu_custom_call.1} parent=1 // pred_fallthru
      _
    // Predicated region
    $region14: #{tpu_custom_call.1} parent=1 // pred_check
      _
    $region15: #{tpu_custom_call.1} parent=1 // pred_check_branch
      %58 = sbr.rel (0) target = $region17
    $region16: #{tpu_custom_call.1} parent=1 // pred_region
      %s60 = ssub.s32 1024, 1024
      %61 = vsyncadd [#allocation9], %s60
      %s62 = sshll.u32 [#allocation8], 4
      %s63 = int_to_ptr.vmem [resolvable:$true] %s62
      %68 = dma.hbm_to_vmem [thread:$0]  %s3, 1024, %s63, [#allocation9], 64, 64, 4
    $region17: #{tpu_custom_call.1} parent=1 // pred_fallthru
      _
    // Predicated region
    $region18: #{tpu_custom_call.1} parent=1 // pred_check
      _
    $region19: #{tpu_custom_call.1} parent=1 // pred_check_branch
      %70 = sbr.rel (0) target = $region21
    $region20: #{tpu_custom_call.1} parent=1 // pred_region
      %s72 = ssub.s32 1024, 1024
      %73 = vsyncadd [#allocation9], %s72
      %s74 = sshll.u32 [#allocation10], 4
      %s75 = int_to_ptr.vmem [resolvable:$true] %s74
      %80 = dma.hbm_to_vmem [thread:$0]  %s4, 1024, %s75, [#allocation9], 64, 64, 4
    $region21: #{tpu_custom_call.1} parent=1 // pred_fallthru
      _
    // Predicated region
    $region22: #{tpu_custom_call.1} parent=1 // pred_check
      _
    $region23: #{tpu_custom_call.1} parent=1 // pred_check_branch
      %82 = sbr.rel (0) target = $region25
    $region24: #{tpu_custom_call.1} parent=1 // pred_region
      _
    $region25: #{tpu_custom_call.1} parent=1 // pred_fallthru
      _
    // Predicated region
    $region26: #{tpu_custom_call.1} parent=1 // pred_check
      _
    $region27: #{tpu_custom_call.1} parent=1 // pred_check_branch
      %84 = sbr.rel (0) target = $region29
    $region28: #{tpu_custom_call.1} parent=1 // pred_region
      %s86 = ssub.s32 1024, 1024
      %87 = vsyncadd [#allocation12], %s86
      %s88 = sshll.u32 [#allocation11], 4
      %s89 = int_to_ptr.vmem [resolvable:$true] %s88
      %94 = dma.hbm_to_vmem [thread:$0]  %s6, 1024, %s89, [#allocation12], 64, 64, 4
    $region29: #{tpu_custom_call.1} parent=1 // pred_fallthru
      _
    // Predicated region
    $region30: #{tpu_custom_call.1} parent=1 // pred_check
      _
    $region31: #{tpu_custom_call.1} parent=1 // pred_check_branch
      %96 = sbr.rel (0) target = $region33
    $region32: #{tpu_custom_call.1} parent=1 // pred_region
      %s98 = ssub.s32 1024, 1024
      %99 = vsyncadd [#allocation12], %s98
      %s100 = sshll.u32 [#allocation13], 4
      %s101 = int_to_ptr.vmem [resolvable:$true] %s100
      %106 = dma.hbm_to_vmem [thread:$0]  %s7, 1024, %s101, [#allocation12], 64, 64, 4
    $region33: #{tpu_custom_call.1} parent=1 // pred_fallthru
      _
    // Predicated region
    $region34: #{tpu_custom_call.1} parent=1 // pred_check
      _
    $region35: #{tpu_custom_call.1} parent=1 // pred_check_branch
      %108 = sbr.rel (0) target = $region37
    $region36: #{tpu_custom_call.1} parent=1 // pred_region
      %s110 = ssub.s32 1024, 1024
      %111 = vsyncadd [#allocation15], %s110
      %s112 = sshll.u32 [#allocation14], 4
      %s113 = int_to_ptr.vmem [resolvable:$true] %s112
      %118 = dma.hbm_to_vmem [thread:$0]  %s8, 1024, %s113, [#allocation15], 64, 64, 4
    $region37: #{tpu_custom_call.1} parent=1 // pred_fallthru
      _
    // Predicated region
    $region38: #{tpu_custom_call.1} parent=1 // pred_check
      _
    $region39: #{tpu_custom_call.1} parent=1 // pred_check_branch
      %120 = sbr.rel (0) target = $region41
    $region40: #{tpu_custom_call.1} parent=1 // pred_region
      _
    $region41: #{tpu_custom_call.1} parent=1 // pred_fallthru
      _
    // Predicated region
    $region42: #{tpu_custom_call.1} parent=1 // pred_check
      _
    $region43: #{tpu_custom_call.1} parent=1 // pred_check_branch
      %122 = sbr.rel (0) target = $region45
    $region44: #{tpu_custom_call.1} parent=1 // pred_region
      %123 = dma.done [#allocation3], 128
    $region45: #{tpu_custom_call.1} parent=1 // pred_fallthru
      _
    // Predicated region
    $region46: #{tpu_custom_call.1} parent=1 // pred_check
      _
    $region47: #{tpu_custom_call.1} parent=1 // pred_check_branch
      %125 = sbr.rel (0) target = $region49
    $region48: #{tpu_custom_call.1} parent=1 // pred_region
      %126 = dma.done [#allocation6], 128
    $region49: #{tpu_custom_call.1} parent=1 // pred_fallthru
      _
    // Predicated region
    $region50: #{tpu_custom_call.1} parent=1 // pred_check
      _
    $region51: #{tpu_custom_call.1} parent=1 // pred_check_branch
      %128 = sbr.rel (0) target = $region53
    $region52: #{tpu_custom_call.1} parent=1 // pred_region
      %129 = dma.done [#allocation6], 1024
    $region53: #{tpu_custom_call.1} parent=1 // pred_fallthru
      _
    // Predicated region
    $region54: #{tpu_custom_call.1} parent=1 // pred_check
      _
    $region55: #{tpu_custom_call.1} parent=1 // pred_check_branch
      %131 = sbr.rel (0) target = $region57
    $region56: #{tpu_custom_call.1} parent=1 // pred_region
      %132 = dma.done [#allocation9], 1024
    $region57: #{tpu_custom_call.1} parent=1 // pred_fallthru
      _
    // Predicated region
    $region58: #{tpu_custom_call.1} parent=1 // pred_check
      _
    $region59: #{tpu_custom_call.1} parent=1 // pred_check_branch
      %134 = sbr.rel (0) target = $region61
    $region60: #{tpu_custom_call.1} parent=1 // pred_region
      %135 = dma.done [#allocation9], 1024
    $region61: #{tpu_custom_call.1} parent=1 // pred_fallthru
      _
    // Predicated region
    $region62: #{tpu_custom_call.1} parent=1 // pred_check
      _
    $region63: #{tpu_custom_call.1} parent=1 // pred_check_branch
      %137 = sbr.rel (0) target = $region65
    $region64: #{tpu_custom_call.1} parent=1 // pred_region
      %138 = dma.done [#allocation12], 1024
    $region65: #{tpu_custom_call.1} parent=1 // pred_fallthru
      _
    // Predicated region
    $region66: #{tpu_custom_call.1} parent=1 // pred_check
      _
    $region67: #{tpu_custom_call.1} parent=1 // pred_check_branch
      %140 = sbr.rel (0) target = $region69
    $region68: #{tpu_custom_call.1} parent=1 // pred_region
      %141 = dma.done [#allocation12], 1024
    $region69: #{tpu_custom_call.1} parent=1 // pred_fallthru
      _
    // Predicated region
    $region70: #{tpu_custom_call.1} parent=1 // pred_check
      _
    $region71: #{tpu_custom_call.1} parent=1 // pred_check_branch
      %143 = sbr.rel (0) target = $region73
    $region72: #{tpu_custom_call.1} parent=1 // pred_region
      %144 = dma.done [#allocation15], 1024
    $region73: #{tpu_custom_call.1} parent=1 // pred_fallthru
      _
    %v146 = vld [vmem:[#allocation2] sm:$0xf]
    %v147 = vld [vmem:[#allocation2 + $0x4] sm:$0xf]
    %v148 = vld [vmem:[#allocation5] sm:$0xf]
    %v149 = vld [vmem:[#allocation5 + $0x4] sm:$0xf]
    %v150 = vunpack.c.l.bf16 %v146
    %v151 = vunpack.c.l.bf16 %v147
    %v152 = vunpack.c.l.bf16 %v148
    %v153 = vunpack.c.l.bf16 %v149
    %v154 = vld [vmem:[#allocation7] sm:$0xf]
    %v155 = vld [vmem:[#allocation7 + $0x4] sm:$0xf]
    %v156 = vld [vmem:[#allocation7 + $0x8] sm:$0xf]
    %v157 = vld [vmem:[#allocation7 + $0xc] sm:$0xf]
    %v158 = vld [vmem:[#allocation7 + $0x10] sm:$0xf]
    %v159 = vld [vmem:[#allocation7 + $0x14] sm:$0xf]
    %v160 = vld [vmem:[#allocation7 + $0x18] sm:$0xf]
    %v161 = vld [vmem:[#allocation7 + $0x1c] sm:$0xf]
    %v162 = vld [vmem:[#allocation7 + $0x20] sm:$0xf]
    %v163 = vld [vmem:[#allocation7 + $0x24] sm:$0xf]
    %v164 = vld [vmem:[#allocation7 + $0x28] sm:$0xf]
    %v165 = vld [vmem:[#allocation7 + $0x2c] sm:$0xf]
    %v166 = vld [vmem:[#allocation7 + $0x30] sm:$0xf]
    %v167 = vld [vmem:[#allocation7 + $0x34] sm:$0xf]
    %v168 = vld [vmem:[#allocation7 + $0x38] sm:$0xf]
    %v169 = vld [vmem:[#allocation7 + $0x3c] sm:$0xf]
    %v170 = vld [vmem:[#allocation8] sm:$0xf]
    %v171 = vld [vmem:[#allocation8 + $0x4] sm:$0xf]
    %v172 = vld [vmem:[#allocation8 + $0x8] sm:$0xf]
    %v173 = vld [vmem:[#allocation8 + $0xc] sm:$0xf]
    %v174 = vld [vmem:[#allocation8 + $0x10] sm:$0xf]
    %v175 = vld [vmem:[#allocation8 + $0x14] sm:$0xf]
    %v176 = vld [vmem:[#allocation8 + $0x18] sm:$0xf]
    %v177 = vld [vmem:[#allocation8 + $0x1c] sm:$0xf]
    %v178 = vld [vmem:[#allocation8 + $0x20] sm:$0xf]
    %v179 = vld [vmem:[#allocation8 + $0x24] sm:$0xf]
    %v180 = vld [vmem:[#allocation8 + $0x28] sm:$0xf]
    %v181 = vld [vmem:[#allocation8 + $0x2c] sm:$0xf]
    %v182 = vld [vmem:[#allocation8 + $0x30] sm:$0xf]
    %v183 = vld [vmem:[#allocation8 + $0x34] sm:$0xf]
    %v184 = vld [vmem:[#allocation8 + $0x38] sm:$0xf]
    %v185 = vld [vmem:[#allocation8 + $0x3c] sm:$0xf]
    %v186 = vld [vmem:[#allocation10] sm:$0xf]
    %v187 = vld [vmem:[#allocation10 + $0x4] sm:$0xf]
    %v188 = vld [vmem:[#allocation10 + $0x8] sm:$0xf]
    %v189 = vld [vmem:[#allocation10 + $0xc] sm:$0xf]
    %v190 = vld [vmem:[#allocation10 + $0x10] sm:$0xf]
    %v191 = vld [vmem:[#allocation10 + $0x14] sm:$0xf]
    %v192 = vld [vmem:[#allocation10 + $0x18] sm:$0xf]
    %v193 = vld [vmem:[#allocation10 + $0x1c] sm:$0xf]
    %v194 = vld [vmem:[#allocation10 + $0x20] sm:$0xf]
    %v195 = vld [vmem:[#allocation10 + $0x24] sm:$0xf]
    %v196 = vld [vmem:[#allocation10 + $0x28] sm:$0xf]
    %v197 = vld [vmem:[#allocation10 + $0x2c] sm:$0xf]
    %v198 = vld [vmem:[#allocation10 + $0x30] sm:$0xf]
    %v199 = vld [vmem:[#allocation10 + $0x34] sm:$0xf]
    %v200 = vld [vmem:[#allocation10 + $0x38] sm:$0xf]
    %v201 = vld [vmem:[#allocation10 + $0x3c] sm:$0xf]
    %v202 = vld [vmem:[%s5] sm:$0xff]
    %v203 = vld [vmem:[%s5 + $0x8] sm:$0xff]
    %v204 = vlaneseq
    %v205 = vshrl.u32 %v204, 7
    %v206 = vsub.s32 0, %v205
    %v207 = vrot.slane %v202, %v206
    %v210 = vunpack.c.l.b16 %v148
    %v211 = vunpack.c.l.b16 %v149
    %v212 = vpack.c.b16 %v211, %v210
    %v230 = vunpack.c.l.b16 %v154
    %v231 = vunpack.c.l.b16 %v155
    %v232 = vunpack.c.l.b16 %v156
    %v233 = vunpack.c.l.b16 %v157
    %v234 = vunpack.c.l.b16 %v158
    %v235 = vunpack.c.l.b16 %v159
    %v236 = vunpack.c.l.b16 %v160
    %v237 = vunpack.c.l.b16 %v161
    %v238 = vunpack.c.l.b16 %v162
    %v239 = vunpack.c.l.b16 %v163
    %v240 = vunpack.c.l.b16 %v164
    %v241 = vunpack.c.l.b16 %v165
    %v242 = vunpack.c.l.b16 %v166
    %v243 = vunpack.c.l.b16 %v167
    %v244 = vunpack.c.l.b16 %v168
    %v245 = vunpack.c.l.b16 %v169
    %v246 = vpack.c.b16 %v231, %v230
    %v247 = vpack.c.b16 %v233, %v232
    %v248 = vpack.c.b16 %v235, %v234
    %v249 = vpack.c.b16 %v237, %v236
    %v250 = vpack.c.b16 %v239, %v238
    %v251 = vpack.c.b16 %v241, %v240
    %v252 = vpack.c.b16 %v243, %v242
    %v253 = vpack.c.b16 %v245, %v244
    %262 = vmatprep.subr.bf16.mxu0 0
    %263 = vmatpush1.bf16.msra.mxu0 %v246
    %264 = vmatprep.subr.bf16.mxu0 0
    %265 = vmatpush1.bf16.msra.mxu0 %v247
    %266 = vmatprep.subr.bf16.mxu0 0
    %267 = vmatpush1.bf16.msra.mxu0 %v248
    %268 = vmatprep.subr.bf16.mxu0 0
    %269 = vmatpush1.bf16.msra.mxu0 %v249
    %270 = vmatprep.subr.bf16.mxu0 0
    %271 = vmatpush1.bf16.msra.mxu0 %v250
    %272 = vmatprep.subr.bf16.mxu0 0
    %273 = vmatpush1.bf16.msra.mxu0 %v251
    %274 = vmatprep.subr.bf16.mxu0 0
    %275 = vmatpush1.bf16.msra.mxu0 %v252
    %276 = vmatprep.subr.bf16.mxu0 0
    %277 = vmatpush1.bf16.msra.mxu0 %v253
    %278 = vmatprep.subr.bf16.mxu0 0
    %279 = vmatpush1.bf16.msra.mxu0 0
    %280 = vmatprep.subr.bf16.mxu0 0
    %281 = vmatpush1.bf16.msra.mxu0 0
    %282 = vmatprep.subr.bf16.mxu0 0
    %283 = vmatpush1.bf16.msra.mxu0 0
    %284 = vmatprep.subr.bf16.mxu0 0
    %285 = vmatpush1.bf16.msra.mxu0 0
    %286 = vmatprep.subr.bf16.mxu0 0
    %287 = vmatpush1.bf16.msra.mxu0 0
    %288 = vmatprep.subr.bf16.mxu0 0
    %289 = vmatpush1.bf16.msra.mxu0 0
    %290 = vmatprep.subr.bf16.mxu0 0
    %291 = vmatpush1.bf16.msra.mxu0 0
    %292 = vmatprep.subr.bf16.mxu0 0
    %293 = vmatpush1.bf16.msra.mxu0 0
    %294 = vmatprep.mubr.bf16.mxu0 0
    %295 = vmatmul.mubr.bf16.gmra.mrb[0].mxu0 %v212
    %v296 = vpop.f32.mrb[0].mxu0
    %v297 = vadd.f32 %v207, %v296
    %v298 = vpop.f32.mrb[0].mxu0
    %v299 = vpop.f32.mrb[0].mxu0
    %v300 = vadd.f32 %v207, %v299
    %v301 = vpop.f32.mrb[0].mxu0
    %302 = vdwg.mxu0
    %v303 = vadd.f32 %v297, %v150
    %v304 = vadd.f32 %v300, %v151
    %305 = vadd.xlane.f32.xlu0 %v303
    %v306 = vpop.xlane.xlu0 %305
    %307 = vadd.xlane.f32.xlu0 %v304
    %v308 = vpop.xlane.xlu0 %307
    %v309 = vmul.f32 %v306, 0.03125
    %v310 = vmul.f32 %v308, 0.03125
    %v311 = vsub.f32 %v303, %v309
    %v312 = vsub.f32 %v304, %v310
    %v313 = vlaneseq
    %v314 = vshrl.u32 %v313, 7
    %v315 = vsub.s32 3, %v314
    %v316 = vrot.slane %v202, %v315
    %v317 = vmul.f32 %v311, %v316
    %v318 = vmul.f32 %v312, %v316
    %v319 = vmul.f32 %v317, %v317
    %v320 = vmul.f32 %v318, %v318
    %321 = vadd.xlane.f32.xlu0 %v319
    %v322 = vpop.xlane.xlu0 %321
    %323 = vadd.xlane.f32.xlu0 %v320
    %v324 = vpop.xlane.xlu0 %323
    %v325 = vmul.f32 %v322, 0.03125
    %v326 = vmul.f32 %v324, 0.03125
    %v327 = vadd.f32 %v325, 1e-05
    %v328 = vadd.f32 %v326, 1e-05
    %v329 = vrsqrt.pop %v327
    %v330 = vrsqrt.pop %v328
    %v331 = vmul.f32 %v317, %v329
    %v332 = vmul.f32 %v318, %v330
    %v333 = vlaneseq
    %v334 = vshrl.u32 %v333, 7
    %v335 = vsub.s32 1, %v334
    %v336 = vrot.slane %v202, %v335
    %v337 = vmul.f32 %v331, %v336
    %v338 = vmul.f32 %v332, %v336
    %v339 = vlaneseq
    %v340 = vshrl.u32 %v339, 7
    %v341 = vsub.s32 2, %v340
    %v342 = vrot.slane %v202, %v341
    %v343 = vadd.f32 %v337, %v342
    %v344 = vadd.f32 %v338, %v342
    %v345 = vpack.c.bf16 %v344, %v343
    %v362 = vunpack.c.l.b16 %v170
    %v363 = vunpack.c.l.b16 %v171
    %v364 = vunpack.c.l.b16 %v172
    %v365 = vunpack.c.l.b16 %v173
    %v366 = vunpack.c.l.b16 %v174
    %v367 = vunpack.c.l.b16 %v175
    %v368 = vunpack.c.l.b16 %v176
    %v369 = vunpack.c.l.b16 %v177
    %v370 = vunpack.c.l.b16 %v178
    %v371 = vunpack.c.l.b16 %v179
    %v372 = vunpack.c.l.b16 %v180
    %v373 = vunpack.c.l.b16 %v181
    %v374 = vunpack.c.l.b16 %v182
    %v375 = vunpack.c.l.b16 %v183
    %v376 = vunpack.c.l.b16 %v184
    %v377 = vunpack.c.l.b16 %v185
    %v378 = vpack.c.b16 %v363, %v362
    %v379 = vpack.c.b16 %v365, %v364
    %v380 = vpack.c.b16 %v367, %v366
    %v381 = vpack.c.b16 %v369, %v368
    %v382 = vpack.c.b16 %v371, %v370
    %v383 = vpack.c.b16 %v373, %v372
    %v384 = vpack.c.b16 %v375, %v374
    %v385 = vpack.c.b16 %v377, %v376
    %394 = vmatprep.subr.bf16.mxu0 0
    %395 = vmatpush1.bf16.msra.mxu0 %v378
    %396 = vmatprep.subr.bf16.mxu0 0
    %397 = vmatpush1.bf16.msra.mxu0 %v379
    %398 = vmatprep.subr.bf16.mxu0 0
    %399 = vmatpush1.bf16.msra.mxu0 %v380
    %400 = vmatprep.subr.bf16.mxu0 0
    %401 = vmatpush1.bf16.msra.mxu0 %v381
    %402 = vmatprep.subr.bf16.mxu0 0
    %403 = vmatpush1.bf16.msra.mxu0 %v382
    %404 = vmatprep.subr.bf16.mxu0 0
    %405 = vmatpush1.bf16.msra.mxu0 %v383
    %406 = vmatprep.subr.bf16.mxu0 0
    %407 = vmatpush1.bf16.msra.mxu0 %v384
    %408 = vmatprep.subr.bf16.mxu0 0
    %409 = vmatpush1.bf16.msra.mxu0 %v385
    %410 = vmatprep.subr.bf16.mxu0 0
    %411 = vmatpush1.bf16.msra.mxu0 0
    %412 = vmatprep.subr.bf16.mxu0 0
    %413 = vmatpush1.bf16.msra.mxu0 0
    %414 = vmatprep.subr.bf16.mxu0 0
    %415 = vmatpush1.bf16.msra.mxu0 0
    %416 = vmatprep.subr.bf16.mxu0 0
    %417 = vmatpush1.bf16.msra.mxu0 0
    %418 = vmatprep.subr.bf16.mxu0 0
    %419 = vmatpush1.bf16.msra.mxu0 0
    %420 = vmatprep.subr.bf16.mxu0 0
    %421 = vmatpush1.bf16.msra.mxu0 0
    %422 = vmatprep.subr.bf16.mxu0 0
    %423 = vmatpush1.bf16.msra.mxu0 0
    %424 = vmatprep.subr.bf16.mxu0 0
    %425 = vmatpush1.bf16.msra.mxu0 0
    %426 = vmatprep.mubr.bf16.mxu0 0
    %427 = vmatmul.mubr.bf16.gmra.mrb[0].mxu0 %v345
    %v428 = vpop.f32.mrb[0].mxu0
    %v429 = vadd.f32 0.0, %v428
    %v430 = vpop.f32.mrb[0].mxu0
    %v431 = vpop.f32.mrb[0].mxu0
    %v432 = vadd.f32 0.0, %v431
    %v433 = vpop.f32.mrb[0].mxu0
    %434 = vdwg.mxu0
    %v435 = vmax.f32 %v429, 0.0
    %v436 = vmax.f32 %v432, 0.0
    %v437 = vpack.c.bf16 %v436, %v435
    %v454 = vunpack.c.l.b16 %v186
    %v455 = vunpack.c.l.b16 %v187
    %v456 = vunpack.c.l.b16 %v188
    %v457 = vunpack.c.l.b16 %v189
    %v458 = vunpack.c.l.b16 %v190
    %v459 = vunpack.c.l.b16 %v191
    %v460 = vunpack.c.l.b16 %v192
    %v461 = vunpack.c.l.b16 %v193
    %v462 = vunpack.c.l.b16 %v194
    %v463 = vunpack.c.l.b16 %v195
    %v464 = vunpack.c.l.b16 %v196
    %v465 = vunpack.c.l.b16 %v197
    %v466 = vunpack.c.l.b16 %v198
    %v467 = vunpack.c.l.b16 %v199
    %v468 = vunpack.c.l.b16 %v200
    %v469 = vunpack.c.l.b16 %v201
    %v470 = vpack.c.b16 %v455, %v454
    %v471 = vpack.c.b16 %v457, %v456
    %v472 = vpack.c.b16 %v459, %v458
    %v473 = vpack.c.b16 %v461, %v460
    %v474 = vpack.c.b16 %v463, %v462
    %v475 = vpack.c.b16 %v465, %v464
    %v476 = vpack.c.b16 %v467, %v466
    %v477 = vpack.c.b16 %v469, %v468
    %486 = vmatprep.subr.bf16.mxu0 0
    %487 = vmatpush1.bf16.msra.mxu0 %v470
    %488 = vmatprep.subr.bf16.mxu0 0
    %489 = vmatpush1.bf16.msra.mxu0 %v471
    %490 = vmatprep.subr.bf16.mxu0 0
    %491 = vmatpush1.bf16.msra.mxu0 %v472
    %492 = vmatprep.subr.bf16.mxu0 0
    %493 = vmatpush1.bf16.msra.mxu0 %v473
    %494 = vmatprep.subr.bf16.mxu0 0
    %495 = vmatpush1.bf16.msra.mxu0 %v474
    %496 = vmatprep.subr.bf16.mxu0 0
    %497 = vmatpush1.bf16.msra.mxu0 %v475
    %498 = vmatprep.subr.bf16.mxu0 0
    %499 = vmatpush1.bf16.msra.mxu0 %v476
    %500 = vmatprep.subr.bf16.mxu0 0
    %501 = vmatpush1.bf16.msra.mxu0 %v477
    %502 = vmatprep.subr.bf16.mxu0 0
    %503 = vmatpush1.bf16.msra.mxu0 0
    %504 = vmatprep.subr.bf16.mxu0 0
    %505 = vmatpush1.bf16.msra.mxu0 0
    %506 = vmatprep.subr.bf16.mxu0 0
    %507 = vmatpush1.bf16.msra.mxu0 0
    %508 = vmatprep.subr.bf16.mxu0 0
    %509 = vmatpush1.bf16.msra.mxu0 0
    %510 = vmatprep.subr.bf16.mxu0 0
    %511 = vmatpush1.bf16.msra.mxu0 0
    %512 = vmatprep.subr.bf16.mxu0 0
    %513 = vmatpush1.bf16.msra.mxu0 0
    %514 = vmatprep.subr.bf16.mxu0 0
    %515 = vmatpush1.bf16.msra.mxu0 0
    %516 = vmatprep.subr.bf16.mxu0 0
    %517 = vmatpush1.bf16.msra.mxu0 0
    %518 = vmatprep.mubr.bf16.mxu0 0
    %519 = vmatmul.mubr.bf16.gmra.mrb[0].mxu0 %v437
    %v520 = vpop.f32.mrb[0].mxu0
    %v521 = vadd.f32 0.0, %v520
    %v522 = vpop.f32.mrb[0].mxu0
    %v523 = vpop.f32.mrb[0].mxu0
    %v524 = vadd.f32 0.0, %v523
    %v525 = vpop.f32.mrb[0].mxu0
    %526 = vdwg.mxu0
    %v527 = vxor.u32 %v521, 2147483648
    %v528 = vxor.u32 %v524, 2147483648
    %v529 = vmul.f32 %v527, 1.442695
    %v530 = vpow.pop %v529
    %v531 = vmul.f32 %v528, 1.442695
    %v532 = vpow.pop %v531
    %v533 = vadd.f32 %v530, 1.0
    %v534 = vadd.f32 %v532, 1.0
    %v535 = vrcp.pop %v533
    %v536 = vmul.f32 1.0, %v535
    %v537 = vrcp.pop %v534
    %v538 = vmul.f32 1.0, %v537
    %v539 = vmul.f32 %v536, 2.0
    %v540 = vmul.f32 %v538, 2.0
    %v541 = vmul.f32 %v343, %v539
    %v542 = vmul.f32 %v344, %v540
    %v543 = vlaneseq
    %v544 = vshrl.u32 %v543, 7
    %v545 = vsub.s32 7, %v544
    %v546 = vrot.slane %v202, %v545
    %v547 = vmul.f32 %v546, %v541
    %v548 = vmul.f32 %v546, %v542
    %549 = vrot.lane.b32.xlu0 %v541, 3
    %v550 = vpop.permute.xlu0 %549
    %551 = vrot.lane.b32.xlu0 %v542, 3
    %v552 = vpop.permute.xlu0 %551
    %v553 = vlaneseq
    %v554 = vshrl.u32 %v553, 7
    %v555 = vsub.s32 4, %v554
    %v556 = vrot.slane %v202, %v555
    %v557 = vmul.f32 %v556, %v550
    %v558 = vmul.f32 %v556, %v552
    %v559 = vadd.f32 %v547, %v557
    %v560 = vadd.f32 %v548, %v558
    %561 = vrot.lane.b32.xlu0 %v541, 2
    %v562 = vpop.permute.xlu0 %561
    %563 = vrot.lane.b32.xlu0 %v542, 2
    %v564 = vpop.permute.xlu0 %563
    %v565 = vlaneseq
    %v566 = vshrl.u32 %v565, 7
    %v567 = vsub.s32 5, %v566
    %v568 = vrot.slane %v202, %v567
    %v569 = vmul.f32 %v568, %v562
    %v570 = vmul.f32 %v568, %v564
    %v571 = vadd.f32 %v559, %v569
    %v572 = vadd.f32 %v560, %v570
    %573 = vrot.lane.b32.xlu0 %v541, 1
    %v574 = vpop.permute.xlu0 %573
    %575 = vrot.lane.b32.xlu0 %v542, 1
    %v576 = vpop.permute.xlu0 %575
    %v577 = vlaneseq
    %v578 = vshrl.u32 %v577, 7
    %v579 = vsub.s32 6, %v578
    %v580 = vrot.slane %v202, %v579
    %v581 = vmul.f32 %v580, %v574
    %v582 = vmul.f32 %v580, %v576
    %v583 = vadd.f32 %v571, %v581
    %v584 = vadd.f32 %v572, %v582
    %585 = vrot.lane.b32.xlu0 %v541, 127
    %v586 = vpop.permute.xlu0 %585
    %587 = vrot.lane.b32.xlu0 %v542, 127
    %v588 = vpop.permute.xlu0 %587
    %v589 = vlaneseq
    %v590 = vshrl.u32 %v589, 7
    %v591 = vsub.s32 0, %v590
    %v592 = vrot.slane %v203, %v591
    %v593 = vmul.f32 %v592, %v586
    %v594 = vmul.f32 %v592, %v588
    %v595 = vadd.f32 %v583, %v593
    %v596 = vadd.f32 %v584, %v594
    %597 = vrot.lane.b32.xlu0 %v541, 126
    %v598 = vpop.permute.xlu0 %597
    %599 = vrot.lane.b32.xlu0 %v542, 126
    %v600 = vpop.permute.xlu0 %599
    %v601 = vlaneseq
    %v602 = vshrl.u32 %v601, 7
    %v603 = vsub.s32 1, %v602
    %v604 = vrot.slane %v203, %v603
    %v605 = vmul.f32 %v604, %v598
    %v606 = vmul.f32 %v604, %v600
    %v607 = vadd.f32 %v595, %v605
    %v608 = vadd.f32 %v596, %v606
    %609 = vrot.lane.b32.xlu0 %v541, 125
    %v610 = vpop.permute.xlu0 %609
    %611 = vrot.lane.b32.xlu0 %v542, 125
    %v612 = vpop.permute.xlu0 %611
    %v613 = vlaneseq
    %v614 = vshrl.u32 %v613, 7
    %v615 = vsub.s32 2, %v614
    %v616 = vrot.slane %v203, %v615
    %v617 = vmul.f32 %v616, %v610
    %v618 = vmul.f32 %v616, %v612
    %v619 = vadd.f32 %v607, %v617
    %v620 = vadd.f32 %v608, %v618
    %v621 = vxor.u32 %v619, 2147483648
    %v622 = vxor.u32 %v620, 2147483648
    %v623 = vmul.f32 %v621, 1.442695
    %v624 = vpow.pop %v623
    %v625 = vmul.f32 %v622, 1.442695
    %v626 = vpow.pop %v625
    %v627 = vadd.f32 %v624, 1.0
    %v628 = vadd.f32 %v626, 1.0
    %v629 = vrcp.pop %v627
    %v630 = vmul.f32 1.0, %v629
    %v631 = vrcp.pop %v628
    %v632 = vmul.f32 1.0, %v631
    %v633 = vmul.f32 %v541, %v630
    %v634 = vmul.f32 %v542, %v632
    %v635 = vld [vmem:[#allocation11] sm:$0xf]
    %v636 = vld [vmem:[#allocation11 + $0x4] sm:$0xf]
    %v637 = vld [vmem:[#allocation11 + $0x8] sm:$0xf]
    %v638 = vld [vmem:[#allocation11 + $0xc] sm:$0xf]
    %v639 = vld [vmem:[#allocation11 + $0x10] sm:$0xf]
    %v640 = vld [vmem:[#allocation11 + $0x14] sm:$0xf]
    %v641 = vld [vmem:[#allocation11 + $0x18] sm:$0xf]
    %v642 = vld [vmem:[#allocation11 + $0x1c] sm:$0xf]
    %v643 = vld [vmem:[#allocation11 + $0x20] sm:$0xf]
    %v644 = vld [vmem:[#allocation11 + $0x24] sm:$0xf]
    %v645 = vld [vmem:[#allocation11 + $0x28] sm:$0xf]
    %v646 = vld [vmem:[#allocation11 + $0x2c] sm:$0xf]
    %v647 = vld [vmem:[#allocation11 + $0x30] sm:$0xf]
    %v648 = vld [vmem:[#allocation11 + $0x34] sm:$0xf]
    %v649 = vld [vmem:[#allocation11 + $0x38] sm:$0xf]
    %v650 = vld [vmem:[#allocation11 + $0x3c] sm:$0xf]
    %v651 = vld [vmem:[#allocation13] sm:$0xf]
    %v652 = vld [vmem:[#allocation13 + $0x4] sm:$0xf]
    %v653 = vld [vmem:[#allocation13 + $0x8] sm:$0xf]
    %v654 = vld [vmem:[#allocation13 + $0xc] sm:$0xf]
    %v655 = vld [vmem:[#allocation13 + $0x10] sm:$0xf]
    %v656 = vld [vmem:[#allocation13 + $0x14] sm:$0xf]
    %v657 = vld [vmem:[#allocation13 + $0x18] sm:$0xf]
    %v658 = vld [vmem:[#allocation13 + $0x1c] sm:$0xf]
    %v659 = vld [vmem:[#allocation13 + $0x20] sm:$0xf]
    %v660 = vld [vmem:[#allocation13 + $0x24] sm:$0xf]
    %v661 = vld [vmem:[#allocation13 + $0x28] sm:$0xf]
    %v662 = vld [vmem:[#allocation13 + $0x2c] sm:$0xf]
    %v663 = vld [vmem:[#allocation13 + $0x30] sm:$0xf]
    %v664 = vld [vmem:[#allocation13 + $0x34] sm:$0xf]
    %v665 = vld [vmem:[#allocation13 + $0x38] sm:$0xf]
    %v666 = vld [vmem:[#allocation13 + $0x3c] sm:$0xf]
    %v667 = vld [vmem:[#allocation14] sm:$0xf]
    %v668 = vld [vmem:[#allocation14 + $0x4] sm:$0xf]
    %v669 = vld [vmem:[#allocation14 + $0x8] sm:$0xf]
    %v670 = vld [vmem:[#allocation14 + $0xc] sm:$0xf]
    %v671 = vld [vmem:[#allocation14 + $0x10] sm:$0xf]
    %v672 = vld [vmem:[#allocation14 + $0x14] sm:$0xf]
    %v673 = vld [vmem:[#allocation14 + $0x18] sm:$0xf]
    %v674 = vld [vmem:[#allocation14 + $0x1c] sm:$0xf]
    %v675 = vld [vmem:[#allocation14 + $0x20] sm:$0xf]
    %v676 = vld [vmem:[#allocation14 + $0x24] sm:$0xf]
    %v677 = vld [vmem:[#allocation14 + $0x28] sm:$0xf]
    %v678 = vld [vmem:[#allocation14 + $0x2c] sm:$0xf]
    %v679 = vld [vmem:[#allocation14 + $0x30] sm:$0xf]
    %v680 = vld [vmem:[#allocation14 + $0x34] sm:$0xf]
    %v681 = vld [vmem:[#allocation14 + $0x38] sm:$0xf]
    %v682 = vld [vmem:[#allocation14 + $0x3c] sm:$0xf]
    %v683 = vld [vmem:[%s9] sm:$0xff]
    %v684 = vld [vmem:[%s9 + $0x8] sm:$0xff]
    %v685 = vlaneseq
    %v686 = vshrl.u32 %v685, 7
    %v687 = vsub.s32 0, %v686
    %v688 = vrot.slane %v683, %v687
    %v691 = vunpack.c.l.b16 %v146
    %v692 = vunpack.c.l.b16 %v147
    %v693 = vpack.c.b16 %v692, %v691
    %v711 = vunpack.c.l.b16 %v635
    %v712 = vunpack.c.l.b16 %v636
    %v713 = vunpack.c.l.b16 %v637
    %v714 = vunpack.c.l.b16 %v638
    %v715 = vunpack.c.l.b16 %v639
    %v716 = vunpack.c.l.b16 %v640
    %v717 = vunpack.c.l.b16 %v641
    %v718 = vunpack.c.l.b16 %v642
    %v719 = vunpack.c.l.b16 %v643
    %v720 = vunpack.c.l.b16 %v644
    %v721 = vunpack.c.l.b16 %v645
    %v722 = vunpack.c.l.b16 %v646
    %v723 = vunpack.c.l.b16 %v647
    %v724 = vunpack.c.l.b16 %v648
    %v725 = vunpack.c.l.b16 %v649
    %v726 = vunpack.c.l.b16 %v650
    %v727 = vpack.c.b16 %v712, %v711
    %v728 = vpack.c.b16 %v714, %v713
    %v729 = vpack.c.b16 %v716, %v715
    %v730 = vpack.c.b16 %v718, %v717
    %v731 = vpack.c.b16 %v720, %v719
    %v732 = vpack.c.b16 %v722, %v721
    %v733 = vpack.c.b16 %v724, %v723
    %v734 = vpack.c.b16 %v726, %v725
    %743 = vmatprep.subr.bf16.mxu0 0
    %744 = vmatpush1.bf16.msra.mxu0 %v727
    %745 = vmatprep.subr.bf16.mxu0 0
    %746 = vmatpush1.bf16.msra.mxu0 %v728
    %747 = vmatprep.subr.bf16.mxu0 0
    %748 = vmatpush1.bf16.msra.mxu0 %v729
    %749 = vmatprep.subr.bf16.mxu0 0
    %750 = vmatpush1.bf16.msra.mxu0 %v730
    %751 = vmatprep.subr.bf16.mxu0 0
    %752 = vmatpush1.bf16.msra.mxu0 %v731
    %753 = vmatprep.subr.bf16.mxu0 0
    %754 = vmatpush1.bf16.msra.mxu0 %v732
    %755 = vmatprep.subr.bf16.mxu0 0
    %756 = vmatpush1.bf16.msra.mxu0 %v733
    %757 = vmatprep.subr.bf16.mxu0 0
    %758 = vmatpush1.bf16.msra.mxu0 %v734
    %759 = vmatprep.subr.bf16.mxu0 0
    %760 = vmatpush1.bf16.msra.mxu0 0
    %761 = vmatprep.subr.bf16.mxu0 0
    %762 = vmatpush1.bf16.msra.mxu0 0
    %763 = vmatprep.subr.bf16.mxu0 0
    %764 = vmatpush1.bf16.msra.mxu0 0
    %765 = vmatprep.subr.bf16.mxu0 0
    %766 = vmatpush1.bf16.msra.mxu0 0
    %767 = vmatprep.subr.bf16.mxu0 0
    %768 = vmatpush1.bf16.msra.mxu0 0
    %769 = vmatprep.subr.bf16.mxu0 0
    %770 = vmatpush1.bf16.msra.mxu0 0
    %771 = vmatprep.subr.bf16.mxu0 0
    %772 = vmatpush1.bf16.msra.mxu0 0
    %773 = vmatprep.subr.bf16.mxu0 0
    %774 = vmatpush1.bf16.msra.mxu0 0
    %775 = vmatprep.mubr.bf16.mxu0 0
    %776 = vmatmul.mubr.bf16.gmra.mrb[0].mxu0 %v693
    %v777 = vpop.f32.mrb[0].mxu0
    %v778 = vadd.f32 %v688, %v777
    %v779 = vpop.f32.mrb[0].mxu0
    %v780 = vpop.f32.mrb[0].mxu0
    %v781 = vadd.f32 %v688, %v780
    %v782 = vpop.f32.mrb[0].mxu0
    %783 = vdwg.mxu0
    %v784 = vadd.f32 %v778, %v152
    %v785 = vadd.f32 %v781, %v153
    %786 = vadd.xlane.f32.xlu0 %v784
    %v787 = vpop.xlane.xlu0 %786
    %788 = vadd.xlane.f32.xlu0 %v785
    %v789 = vpop.xlane.xlu0 %788
    %v790 = vmul.f32 %v787, 0.03125
    %v791 = vmul.f32 %v789, 0.03125
    %v792 = vsub.f32 %v784, %v790
    %v793 = vsub.f32 %v785, %v791
    %v794 = vlaneseq
    %v795 = vshrl.u32 %v794, 7
    %v796 = vsub.s32 3, %v795
    %v797 = vrot.slane %v683, %v796
    %v798 = vmul.f32 %v792, %v797
    %v799 = vmul.f32 %v793, %v797
    %v800 = vmul.f32 %v798, %v798
    %v801 = vmul.f32 %v799, %v799
    %802 = vadd.xlane.f32.xlu0 %v800
    %v803 = vpop.xlane.xlu0 %802
    %804 = vadd.xlane.f32.xlu0 %v801
    %v805 = vpop.xlane.xlu0 %804
    %v806 = vmul.f32 %v803, 0.03125
    %v807 = vmul.f32 %v805, 0.03125
    %v808 = vadd.f32 %v806, 1e-05
    %v809 = vadd.f32 %v807, 1e-05
    %v810 = vrsqrt.pop %v808
    %v811 = vrsqrt.pop %v809
    %v812 = vmul.f32 %v798, %v810
    %v813 = vmul.f32 %v799, %v811
    %v814 = vlaneseq
    %v815 = vshrl.u32 %v814, 7
    %v816 = vsub.s32 1, %v815
    %v817 = vrot.slane %v683, %v816
    %v818 = vmul.f32 %v812, %v817
    %v819 = vmul.f32 %v813, %v817
    %v820 = vlaneseq
    %v821 = vshrl.u32 %v820, 7
    %v822 = vsub.s32 2, %v821
    %v823 = vrot.slane %v683, %v822
    %v824 = vadd.f32 %v818, %v823
    %v825 = vadd.f32 %v819, %v823
    %v826 = vpack.c.bf16 %v825, %v824
    %v843 = vunpack.c.l.b16 %v651
    %v844 = vunpack.c.l.b16 %v652
    %v845 = vunpack.c.l.b16 %v653
    %v846 = vunpack.c.l.b16 %v654
    %v847 = vunpack.c.l.b16 %v655
    %v848 = vunpack.c.l.b16 %v656
    %v849 = vunpack.c.l.b16 %v657
    %v850 = vunpack.c.l.b16 %v658
    %v851 = vunpack.c.l.b16 %v659
    %v852 = vunpack.c.l.b16 %v660
    %v853 = vunpack.c.l.b16 %v661
    %v854 = vunpack.c.l.b16 %v662
    %v855 = vunpack.c.l.b16 %v663
    %v856 = vunpack.c.l.b16 %v664
    %v857 = vunpack.c.l.b16 %v665
    %v858 = vunpack.c.l.b16 %v666
    %v859 = vpack.c.b16 %v844, %v843
    %v860 = vpack.c.b16 %v846, %v845
    %v861 = vpack.c.b16 %v848, %v847
    %v862 = vpack.c.b16 %v850, %v849
    %v863 = vpack.c.b16 %v852, %v851
    %v864 = vpack.c.b16 %v854, %v853
    %v865 = vpack.c.b16 %v856, %v855
    %v866 = vpack.c.b16 %v858, %v857
    %875 = vmatprep.subr.bf16.mxu0 0
    %876 = vmatpush1.bf16.msra.mxu0 %v859
    %877 = vmatprep.subr.bf16.mxu0 0
    %878 = vmatpush1.bf16.msra.mxu0 %v860
    %879 = vmatprep.subr.bf16.mxu0 0
    %880 = vmatpush1.bf16.msra.mxu0 %v861
    %881 = vmatprep.subr.bf16.mxu0 0
    %882 = vmatpush1.bf16.msra.mxu0 %v862
    %883 = vmatprep.subr.bf16.mxu0 0
    %884 = vmatpush1.bf16.msra.mxu0 %v863
    %885 = vmatprep.subr.bf16.mxu0 0
    %886 = vmatpush1.bf16.msra.mxu0 %v864
    %887 = vmatprep.subr.bf16.mxu0 0
    %888 = vmatpush1.bf16.msra.mxu0 %v865
    %889 = vmatprep.subr.bf16.mxu0 0
    %890 = vmatpush1.bf16.msra.mxu0 %v866
    %891 = vmatprep.subr.bf16.mxu0 0
    %892 = vmatpush1.bf16.msra.mxu0 0
    %893 = vmatprep.subr.bf16.mxu0 0
    %894 = vmatpush1.bf16.msra.mxu0 0
    %895 = vmatprep.subr.bf16.mxu0 0
    %896 = vmatpush1.bf16.msra.mxu0 0
    %897 = vmatprep.subr.bf16.mxu0 0
    %898 = vmatpush1.bf16.msra.mxu0 0
    %899 = vmatprep.subr.bf16.mxu0 0
    %900 = vmatpush1.bf16.msra.mxu0 0
    %901 = vmatprep.subr.bf16.mxu0 0
    %902 = vmatpush1.bf16.msra.mxu0 0
    %903 = vmatprep.subr.bf16.mxu0 0
    %904 = vmatpush1.bf16.msra.mxu0 0
    %905 = vmatprep.subr.bf16.mxu0 0
    %906 = vmatpush1.bf16.msra.mxu0 0
    %907 = vmatprep.mubr.bf16.mxu0 0
    %908 = vmatmul.mubr.bf16.gmra.mrb[0].mxu0 %v826
    %v909 = vpop.f32.mrb[0].mxu0
    %v910 = vadd.f32 0.0, %v909
    %v911 = vpop.f32.mrb[0].mxu0
    %v912 = vpop.f32.mrb[0].mxu0
    %v913 = vadd.f32 0.0, %v912
    %v914 = vpop.f32.mrb[0].mxu0
    %915 = vdwg.mxu0
    %v916 = vmax.f32 %v910, 0.0
    %v917 = vmax.f32 %v913, 0.0
    %v918 = vpack.c.bf16 %v917, %v916
    %v935 = vunpack.c.l.b16 %v667
    %v936 = vunpack.c.l.b16 %v668
    %v937 = vunpack.c.l.b16 %v669
    %v938 = vunpack.c.l.b16 %v670
    %v939 = vunpack.c.l.b16 %v671
    %v940 = vunpack.c.l.b16 %v672
    %v941 = vunpack.c.l.b16 %v673
    %v942 = vunpack.c.l.b16 %v674
    %v943 = vunpack.c.l.b16 %v675
    %v944 = vunpack.c.l.b16 %v676
    %v945 = vunpack.c.l.b16 %v677
    %v946 = vunpack.c.l.b16 %v678
    %v947 = vunpack.c.l.b16 %v679
    %v948 = vunpack.c.l.b16 %v680
    %v949 = vunpack.c.l.b16 %v681
    %v950 = vunpack.c.l.b16 %v682
    %v951 = vpack.c.b16 %v936, %v935
    %v952 = vpack.c.b16 %v938, %v937
    %v953 = vpack.c.b16 %v940, %v939
    %v954 = vpack.c.b16 %v942, %v941
    %v955 = vpack.c.b16 %v944, %v943
    %v956 = vpack.c.b16 %v946, %v945
    %v957 = vpack.c.b16 %v948, %v947
    %v958 = vpack.c.b16 %v950, %v949
    %967 = vmatprep.subr.bf16.mxu0 0
    %968 = vmatpush1.bf16.msra.mxu0 %v951
    %969 = vmatprep.subr.bf16.mxu0 0
    %970 = vmatpush1.bf16.msra.mxu0 %v952
    %971 = vmatprep.subr.bf16.mxu0 0
    %972 = vmatpush1.bf16.msra.mxu0 %v953
    %973 = vmatprep.subr.bf16.mxu0 0
    %974 = vmatpush1.bf16.msra.mxu0 %v954
    %975 = vmatprep.subr.bf16.mxu0 0
    %976 = vmatpush1.bf16.msra.mxu0 %v955
    %977 = vmatprep.subr.bf16.mxu0 0
    %978 = vmatpush1.bf16.msra.mxu0 %v956
    %979 = vmatprep.subr.bf16.mxu0 0
    %980 = vmatpush1.bf16.msra.mxu0 %v957
    %981 = vmatprep.subr.bf16.mxu0 0
    %982 = vmatpush1.bf16.msra.mxu0 %v958
    %983 = vmatprep.subr.bf16.mxu0 0
    %984 = vmatpush1.bf16.msra.mxu0 0
    %985 = vmatprep.subr.bf16.mxu0 0
    %986 = vmatpush1.bf16.msra.mxu0 0
    %987 = vmatprep.subr.bf16.mxu0 0
    %988 = vmatpush1.bf16.msra.mxu0 0
    %989 = vmatprep.subr.bf16.mxu0 0
    %990 = vmatpush1.bf16.msra.mxu0 0
    %991 = vmatprep.subr.bf16.mxu0 0
    %992 = vmatpush1.bf16.msra.mxu0 0
    %993 = vmatprep.subr.bf16.mxu0 0
    %994 = vmatpush1.bf16.msra.mxu0 0
    %995 = vmatprep.subr.bf16.mxu0 0
    %996 = vmatpush1.bf16.msra.mxu0 0
    %997 = vmatprep.subr.bf16.mxu0 0
    %998 = vmatpush1.bf16.msra.mxu0 0
    %999 = vmatprep.mubr.bf16.mxu0 0
    %1000 = vmatmul.mubr.bf16.gmra.mrb[0].mxu0 %v918
    %v1001 = vpop.f32.mrb[0].mxu0
    %v1002 = vadd.f32 0.0, %v1001
    %v1003 = vpop.f32.mrb[0].mxu0
    %v1004 = vpop.f32.mrb[0].mxu0
    %v1005 = vadd.f32 0.0, %v1004
    %v1006 = vpop.f32.mrb[0].mxu0
    %1007 = vdwg.mxu0
    %v1008 = vxor.u32 %v1002, 2147483648
    %v1009 = vxor.u32 %v1005, 2147483648
    %v1010 = vmul.f32 %v1008, 1.442695
    %v1011 = vpow.pop %v1010
    %v1012 = vmul.f32 %v1009, 1.442695
    %v1013 = vpow.pop %v1012
    %v1014 = vadd.f32 %v1011, 1.0
    %v1015 = vadd.f32 %v1013, 1.0
    %v1016 = vrcp.pop %v1014
    %v1017 = vmul.f32 1.0, %v1016
    %v1018 = vrcp.pop %v1015
    %v1019 = vmul.f32 1.0, %v1018
    %v1020 = vmul.f32 %v1017, 2.0
    %v1021 = vmul.f32 %v1019, 2.0
    %v1022 = vmul.f32 %v824, %v1020
    %v1023 = vmul.f32 %v825, %v1021
    %v1024 = vlaneseq
    %v1025 = vshrl.u32 %v1024, 7
    %v1026 = vsub.s32 7, %v1025
    %v1027 = vrot.slane %v683, %v1026
    %v1028 = vmul.f32 %v1027, %v1022
    %v1029 = vmul.f32 %v1027, %v1023
    %1030 = vrot.lane.b32.xlu0 %v1022, 3
    %v1031 = vpop.permute.xlu0 %1030
    %1032 = vrot.lane.b32.xlu0 %v1023, 3
    %v1033 = vpop.permute.xlu0 %1032
    %v1034 = vlaneseq
    %v1035 = vshrl.u32 %v1034, 7
    %v1036 = vsub.s32 4, %v1035
    %v1037 = vrot.slane %v683, %v1036
    %v1038 = vmul.f32 %v1037, %v1031
    %v1039 = vmul.f32 %v1037, %v1033
    %v1040 = vadd.f32 %v1028, %v1038
    %v1041 = vadd.f32 %v1029, %v1039
    %1042 = vrot.lane.b32.xlu0 %v1022, 2
    %v1043 = vpop.permute.xlu0 %1042
    %1044 = vrot.lane.b32.xlu0 %v1023, 2
    %v1045 = vpop.permute.xlu0 %1044
    %v1046 = vlaneseq
    %v1047 = vshrl.u32 %v1046, 7
    %v1048 = vsub.s32 5, %v1047
    %v1049 = vrot.slane %v683, %v1048
    %v1050 = vmul.f32 %v1049, %v1043
    %v1051 = vmul.f32 %v1049, %v1045
    %v1052 = vadd.f32 %v1040, %v1050
    %v1053 = vadd.f32 %v1041, %v1051
    %1054 = vrot.lane.b32.xlu0 %v1022, 1
    %v1055 = vpop.permute.xlu0 %1054
    %1056 = vrot.lane.b32.xlu0 %v1023, 1
    %v1057 = vpop.permute.xlu0 %1056
    %v1058 = vlaneseq
    %v1059 = vshrl.u32 %v1058, 7
    %v1060 = vsub.s32 6, %v1059
    %v1061 = vrot.slane %v683, %v1060
    %v1062 = vmul.f32 %v1061, %v1055
    %v1063 = vmul.f32 %v1061, %v1057
    %v1064 = vadd.f32 %v1052, %v1062
    %v1065 = vadd.f32 %v1053, %v1063
    %1066 = vrot.lane.b32.xlu0 %v1022, 127
    %v1067 = vpop.permute.xlu0 %1066
    %1068 = vrot.lane.b32.xlu0 %v1023, 127
    %v1069 = vpop.permute.xlu0 %1068
    %v1070 = vlaneseq
    %v1071 = vshrl.u32 %v1070, 7
    %v1072 = vsub.s32 0, %v1071
    %v1073 = vrot.slane %v684, %v1072
    %v1074 = vmul.f32 %v1073, %v1067
    %v1075 = vmul.f32 %v1073, %v1069
    %v1076 = vadd.f32 %v1064, %v1074
    %v1077 = vadd.f32 %v1065, %v1075
    %1078 = vrot.lane.b32.xlu0 %v1022, 126
    %v1079 = vpop.permute.xlu0 %1078
    %1080 = vrot.lane.b32.xlu0 %v1023, 126
    %v1081 = vpop.permute.xlu0 %1080
    %v1082 = vlaneseq
    %v1083 = vshrl.u32 %v1082, 7
    %v1084 = vsub.s32 1, %v1083
    %v1085 = vrot.slane %v684, %v1084
    %v1086 = vmul.f32 %v1085, %v1079
    %v1087 = vmul.f32 %v1085, %v1081
    %v1088 = vadd.f32 %v1076, %v1086
    %v1089 = vadd.f32 %v1077, %v1087
    %1090 = vrot.lane.b32.xlu0 %v1022, 125
    %v1091 = vpop.permute.xlu0 %1090
    %1092 = vrot.lane.b32.xlu0 %v1023, 125
    %v1093 = vpop.permute.xlu0 %1092
    %v1094 = vlaneseq
    %v1095 = vshrl.u32 %v1094, 7
    %v1096 = vsub.s32 2, %v1095
    %v1097 = vrot.slane %v684, %v1096
    %v1098 = vmul.f32 %v1097, %v1091
    %v1099 = vmul.f32 %v1097, %v1093
    %v1100 = vadd.f32 %v1088, %v1098
    %v1101 = vadd.f32 %v1089, %v1099
    %v1102 = vxor.u32 %v1100, 2147483648
    %v1103 = vxor.u32 %v1101, 2147483648
    %v1104 = vmul.f32 %v1102, 1.442695
    %v1105 = vpow.pop %v1104
    %v1106 = vmul.f32 %v1103, 1.442695
    %v1107 = vpow.pop %v1106
    %v1108 = vadd.f32 %v1105, 1.0
    %v1109 = vadd.f32 %v1107, 1.0
    %v1110 = vrcp.pop %v1108
    %v1111 = vmul.f32 1.0, %v1110
    %v1112 = vrcp.pop %v1109
    %v1113 = vmul.f32 1.0, %v1112
    %v1114 = vmul.f32 %v1022, %v1111
    %v1115 = vmul.f32 %v1023, %v1113
    %v1116 = vmin.f32 %v1114, %v633
    %v1117 = vmin.f32 %v1115, %v634
    %1118 = vst [vmem:[#allocation16] sm:$0xff] %v1116
    %1119 = vst [vmem:[#allocation16 + $0x8] sm:$0xff] %v1117
    // Predicated region
    $region74: #{tpu_custom_call.1} parent=1 // pred_check
      _
    $region75: #{tpu_custom_call.1} parent=1 // pred_check_branch
      %1121 = sbr.rel (0) target = $region77
    $region76: #{tpu_custom_call.1} parent=1 // pred_region
      %s1123 = ssub.s32 256, 256
      %1124 = vsyncadd [#allocation4], %s1123
      %s1125 = sshll.u32 [#allocation16], 4
      %s1126 = int_to_ptr.vmem [resolvable:$true] %s1125
      %1131 = dma.vmem_to_hbm [thread:$0]  %s1126, 256, %s10, [#allocation4], 128, 128, 8
    $region77: #{tpu_custom_call.1} parent=1 // pred_fallthru
      _
    // Predicated region
    $region78: #{tpu_custom_call.1} parent=1 // pred_check
      _
    $region79: #{tpu_custom_call.1} parent=1 // pred_check_branch
      %1133 = sbr.rel (0) target = $region81
    $region80: #{tpu_custom_call.1} parent=1 // pred_region
      %1134 = dma.done [#allocation4], 256
    $region81: #{tpu_custom_call.1} parent=1 // pred_fallthru
      _
    %1135 = vsyncpa [#allocation3], 1
    %1136 = vsyncpa [#allocation6], 1
    %1137 = vsyncpa [#allocation9], 1
    %1138 = vsyncpa [#allocation12], 1
    %1139 = vsyncpa [#allocation15], 1
    %1140 = vsyncpa [#allocation4], 1

</llo_original>
